<compile_context>
chip_gen: v7x
topology: tpu7x:2x2x1
jax: 0.10.0
libtpu: 0.0.40
codegen_flags: <defaults>
</compile_context>

<pallas_src>
import numpy as np

import jax
import jax.numpy as jnp
from jax import lax
from jax.experimental import pallas as pl
from jax.experimental.pallas import tpu as pltpu

C1 = 6          # conv1 output channels
C1P = 8         # conv1 channels padded to the sublane tile
C2 = 12         # conv2 output channels
HIDDEN = 128    # LSTM hidden size (fixed by the module)


# ----------------------------------------------------------------------------
# Fused kernel: conv1 (VPU) + conv2 (one im2col MXU matmul) + flatten +
# single-step LSTM (gate order i, f, g, o) + output Linear.
# ----------------------------------------------------------------------------
def make_agent_net_kernel(H, W):
    HW = H * W
    PAD = W + 1                                   # max |tap shift| on the flat frame
    # tap t = dy*3+dx  ->  lane shift s, and which column mask (dx) it needs
    taps = [((dy - 1) * W + (dx - 1), dx) for dy in range(3) for dx in range(3)]

    def kernel(x_ref, w1t_ref, b1c_ref, cmask_ref, w2t_ref, b2c_ref,
               h0_ref, c0_ref, wcat_ref, blstm_ref, wout_ref, bout_ref,
               y_ref, h1_ref, c1_ref):
        f32, bf16 = jnp.float32, jnp.bfloat16

        # ---- in-kernel "same" padding: zero lanes around the flat spatial frame
        zx = jnp.zeros((1, PAD), f32)
        xrow = jnp.concatenate([zx, x_ref[...], zx], axis=1)          # (1, HW+2*PAD)

        # ---- conv1: 3x3, 1 -> 6 channels, pure VPU (no MXU) --------------------
        z1 = jnp.zeros((C1P, HW), f32)
        for t, (s, dx) in enumerate(taps):
            win = xrow[:, PAD + s:PAD + s + HW] * cmask_ref[dx:dx + 1, :]
            z1 = z1 + w1t_ref[:, t:t + 1] * win                       # (C1P,1)*(1,HW)
        z1 = z1 + b1c_ref[...]

        # ---- conv2: 3x3, 6 -> 12 channels, ONE im2col matmul on the MXU --------
        z1pad = jnp.zeros((C1P, PAD), f32)
        z1p = jnp.concatenate([z1pad, z1, z1pad], axis=1)             # (C1P, HW+2*PAD)
        pieces = [z1p[:, PAD + s:PAD + s + HW] * cmask_ref[dx:dx + 1, :]
                  for (s, dx) in taps]
        patches = jnp.concatenate(pieces, axis=0).astype(bf16)        # (9*C1P, HW)
        z2 = jnp.dot(w2t_ref[...], patches,
                     preferred_element_type=f32) + b2c_ref[...]       # (C2, HW)

        # ---- nn.Flatten in PyTorch (c, h, w) order + fused LSTM gate matmul ----
        # channels-first rows placed side by side on the lane axis == NCHW flatten
        xh = jnp.concatenate([z2[c:c + 1, :] for c in range(C2)] + [h0_ref[...]],
                             axis=1).astype(bf16)                     # (1, C2*HW+128)
        gates = jnp.dot(xh, wcat_ref[...],
                        preferred_element_type=f32) + blstm_ref[...]  # (1, 4*HIDDEN)

        def sig(v):                        # exp runs on the EUP; math stays f32
            return 1.0 / (1.0 + jnp.exp(-v))

        i = sig(gates[:, 0 * HIDDEN:1 * HIDDEN])
        f = sig(gates[:, 1 * HIDDEN:2 * HIDDEN])
        g = jnp.tanh(gates[:, 2 * HIDDEN:3 * HIDDEN])
        o = sig(gates[:, 3 * HIDDEN:4 * HIDDEN])
        c1 = f * c0_ref[...] + i * g
        h1 = o * jnp.tanh(c1)

        y_ref[...] = jnp.dot(h1.astype(bf16), wout_ref[...],
                             preferred_element_type=f32) + bout_ref[...]
        h1_ref[...] = h1
        c1_ref[...] = c1

    return kernel


def agent_net_forward(x_nchw, kp):
    """Fused AgentNet.forward; returns (y, (h1, c1))."""
    N, C, H, W = x_nchw.shape
    assert N == 1, "initial hidden state (1, 1, 128) constrains batch to 1"
    assert C == 1, "linear_flatten == 12*H*W requires in_channels == 1"
    HW = H * W
    n_out = kp["bout"].shape[1]
    x_row = x_nchw.reshape(1, HW).astype(jnp.float32)   # free layout glue

    vspec = pl.BlockSpec(memory_space=pltpu.MemorySpace.VMEM)
    y, h1, c1 = pl.pallas_call(
        make_agent_net_kernel(H, W),
        out_shape=(jax.ShapeDtypeStruct((1, n_out), jnp.float32),
                   jax.ShapeDtypeStruct((1, HIDDEN), jnp.float32),
                   jax.ShapeDtypeStruct((1, HIDDEN), jnp.float32)),
        in_specs=[vspec] * 12,
        out_specs=(vspec, vspec, vspec),
        compiler_params=pltpu.CompilerParams(
            vmem_limit_bytes=8 * 1024 * 1024),     # <2 MiB working set; keep it modest
    )(x_row, kp["w1t"], kp["b1c"], kp["cmask"], kp["w2t"], kp["b2c"],
      kp["h0"], kp["c0"], kp["wcat"], kp["b_lstm"], kp["wout"], kp["bout"])
    return y, (h1, c1)


# ----------------------------------------------------------------------------
# Parameters: PyTorch-layout synthetic init + one-time repack to kernel layout.
# ----------------------------------------------------------------------------
def init_params(key, C, H, W, n_out, hidden=HIDDEN):
    ks = jax.random.split(key, 12)

    def u(k, shape, bound):
        return jax.random.uniform(k, shape, jnp.float32, -bound, bound)

    lin_flat = C * H * W * 3 * 4
    assert lin_flat == C2 * H * W, "AgentNet requires in_channels == 1"
    k1 = 1.0 / (C * 9) ** 0.5
    k2 = 1.0 / (C1 * 9) ** 0.5
    kl = 1.0 / hidden ** 0.5
    return dict(
        w1=u(ks[0], (C1, C, 3, 3), k1), b1=u(ks[1], (C1,), k1),          # OIHW
        w2=u(ks[2], (C2, C1, 3, 3), k2), b2=u(ks[3], (C2,), k2),
        wih_t=u(ks[4], (lin_flat, 4 * hidden), kl),                      # = W_ih^T
        whh_t=u(ks[5], (hidden, 4 * hidden), kl),                        # = W_hh^T
        b_lstm=(u(ks[6], (4 * hidden,), kl)
                + u(ks[7], (4 * hidden,), kl)).reshape(1, 4 * hidden),   # b_ih + b_hh
        h0=jax.random.uniform(ks[8], (1, hidden), jnp.float32),
        c0=jax.random.uniform(ks[9], (1, hidden), jnp.float32),
        wout_t=u(ks[10], (hidden, n_out), kl), bout=u(ks[11], (1, n_out), kl),
    )


def prep_kernel_params(p, H, W):
    """One-time repack of PyTorch-layout parameters into kernel layout."""
    f32, bf16 = jnp.float32, jnp.bfloat16
    HW = H * W
    cin = p["w1"].shape[1]
    assert cin == 1

    # conv1: (C1, 1, 3, 3) -> (C1P, 9), column = tap (dy*3+dx), channels padded to 8.
    w1t = jnp.zeros((C1P, 9), f32).at[:C1, :].set(p["w1"].reshape(C1, 9))
    b1c = jnp.zeros((C1P, 1), f32).at[:C1, 0].set(p["b1"])

    # conv2: (C2, C1, 3, 3) -> (C2, 9*C1P), column = tap*C1P + cin (matches patches).
    w2r = jnp.transpose(p["w2"], (0, 2, 3, 1)).reshape(C2, 9, C1)
    w2t = (jnp.zeros((C2, 9, C1P), f32).at[:, :, :C1].set(w2r)
           .reshape(C2, 9 * C1P).astype(bf16))
    b2c = p["b2"].reshape(C2, 1)

    # column masks for horizontal tap offsets dx-1 in {-1, 0, +1}: zero the lanes
    # that would otherwise wrap across an image row in the flat-frame layout.
    col = np.arange(HW) % W
    cmask = np.stack([col != 0, np.ones(HW, bool), col != W - 1]).astype(np.float32)

    # LSTM: concatenate [W_ih^T ; W_hh^T] -> single gate matmul; store in bf16.
    wcat = jnp.concatenate([p["wih_t"], p["whh_t"]], axis=0).astype(bf16)

    return dict(w1t=w1t, b1c=b1c, cmask=jnp.asarray(cmask), w2t=w2t, b2c=b2c,
                h0=p["h0"], c0=p["c0"], wcat=wcat, b_lstm=p["b_lstm"],
                wout=p["wout_t"].astype(bf16), bout=p["bout"])


# ----------------------------------------------------------------------------
# Independent pure-JAX reference with the module's semantics (lax.conv path,
# PyTorch NCHW flatten, separate gate matmuls).  Like the kernel it uses the
# identical bf16-rounded weights for the big matmuls with f32 accumulation.
# ----------------------------------------------------------------------------
def ref_forward(x_nchw, p):
    f32, bf16 = jnp.float32, jnp.bfloat16
    dn = ("NCHW", "HWIO", "NCHW")
    w1 = jnp.transpose(p["w1"], (2, 3, 1, 0))                # OIHW -> HWIO
    w2 = jnp.transpose(p["w2"], (2, 3, 1, 0)).astype(bf16)
    z1 = lax.conv_general_dilated(x_nchw, w1, (1, 1), "SAME", dimension_numbers=dn,
                                  precision=lax.Precision.HIGHEST)
    z1 = z1 + p["b1"].reshape(1, -1, 1, 1)
    z2 = lax.conv_general_dilated(z1.astype(bf16), w2, (1, 1), "SAME",
                                  dimension_numbers=dn, preferred_element_type=f32)
    z2 = z2 + p["b2"].reshape(1, -1, 1, 1)
    xf = z2.reshape(1, -1)                                   # NCHW flatten: (c, h, w)
    gates = (jnp.dot(xf.astype(bf16), p["wih_t"].astype(bf16),
                     preferred_element_type=f32)
             + jnp.dot(p["h0"].astype(bf16), p["whh_t"].astype(bf16),
                       preferred_element_type=f32)
             + p["b_lstm"])
    sig = lambda v: 1.0 / (1.0 + jnp.exp(-v))
    i = sig(gates[:, :HIDDEN])
    f = sig(gates[:, HIDDEN:2 * HIDDEN])
    g = jnp.tanh(gates[:, 2 * HIDDEN:3 * HIDDEN])
    o = sig(gates[:, 3 * HIDDEN:])
    c1 = f * p["c0"] + i * g
    h1 = o * jnp.tanh(c1)
    y = jnp.dot(h1.astype(bf16), p["wout_t"].astype(bf16),
                preferred_element_type=f32) + p["bout"]
    return y, h1, c1


if __name__ == "__main__":
    key = jax.random.PRNGKey(0)
    kx, kparam = jax.random.split(key)

    # Shapes implied by the module: batch=1 (hidden state), in_channels=1
    # (linear_flatten consistency), 8x8 spatial grid, action_space = 4 (int).
    B, C, H, W = 1, 1, 8, 8
    n_out = 4

    x = jax.random.normal(kx, (B, C, H, W), dtype=jnp.float32)
    params = init_params(kparam, C, H, W, n_out)
    kparams = prep_kernel_params(params, H, W)

    y, (h1, c1) = agent_net_forward(x, kparams)
    y, h1, c1 = jax.block_until_ready((y, h1, c1))

    y_ref, h1_ref, c1_ref = ref_forward(x, params)
    err_y = float(jnp.max(jnp.abs(y - y_ref)))
    err_h = float(jnp.max(jnp.abs(h1 - h1_ref)))
    err_c = float(jnp.max(jnp.abs(c1 - c1_ref)))

    assert y.shape == (B, n_out)
    # Both sides share the identical bf16-rounded weights with f32 accumulation:
    # typical max-abs error is ~1e-6; 1e-3 leaves margin for rare bf16
    # cast-boundary flips of intermediate activations.
    assert err_y < 1e-3 and err_h < 1e-3 and err_c < 1e-3, (err_y, err_h, err_c)
    print("KERNEL_OK")
</pallas_src>

<mosaic_0001>
module attributes {stable_mosaic.version = 11 : i64} {
  func.func @kernel(%arg0: memref<1x64xf32, #tpu.memory_space<vmem>>, %arg1: memref<8x9xf32, #tpu.memory_space<vmem>>, %arg2: memref<8x1xf32, #tpu.memory_space<vmem>>, %arg3: memref<3x64xf32, #tpu.memory_space<vmem>>, %arg4: memref<12x72xbf16, #tpu.memory_space<vmem>>, %arg5: memref<12x1xf32, #tpu.memory_space<vmem>>, %arg6: memref<1x128xf32, #tpu.memory_space<vmem>>, %arg7: memref<1x128xf32, #tpu.memory_space<vmem>>, %arg8: memref<896x512xbf16, #tpu.memory_space<vmem>>, %arg9: memref<1x512xf32, #tpu.memory_space<vmem>>, %arg10: memref<128x4xbf16, #tpu.memory_space<vmem>>, %arg11: memref<1x4xf32, #tpu.memory_space<vmem>>, %arg12: memref<1x4xf32, #tpu.memory_space<vmem>>, %arg13: memref<1x128xf32, #tpu.memory_space<vmem>>, %arg14: memref<1x128xf32, #tpu.memory_space<vmem>>) attributes {dimension_semantics = [], scalar_prefetch = 0 : i64, scratch_operands = 0 : i64, tpu.core_type = #tpu.core_type<tc>} {
    %cst = arith.constant 0.000000e+00 : f32
    %0 = vector.broadcast %cst : f32 to vector<1x9xf32>
    %c0 = arith.constant 0 : index
    %c0_0 = arith.constant 0 : index
    %1 = vector.load %arg0[%c0, %c0_0] : memref<1x64xf32, #tpu.memory_space<vmem>>, vector<1x64xf32>
    %2 = tpu.concatenate %0, %1, %0 in 1 : vector<1x9xf32>, vector<1x64xf32>, vector<1x9xf32> -> vector<1x82xf32>
    %cst_1 = arith.constant 0.000000e+00 : f32
    %3 = vector.broadcast %cst_1 : f32 to vector<8x64xf32>
    %4 = vector.extract_strided_slice %2 {offsets = [0, 0], sizes = [1, 64], strides = [1, 1]} : vector<1x82xf32> to vector<1x64xf32>
    %c0_2 = arith.constant 0 : index
    %c0_3 = arith.constant 0 : index
    %5 = vector.load %arg3[%c0_2, %c0_3] : memref<3x64xf32, #tpu.memory_space<vmem>>, vector<1x64xf32>
    %6 = arith.mulf %4, %5 : vector<1x64xf32>
    %c0_4 = arith.constant 0 : index
    %c0_5 = arith.constant 0 : index
    %7 = vector.load %arg1[%c0_4, %c0_5] : memref<8x9xf32, #tpu.memory_space<vmem>>, vector<8x1xf32>
    %8 = vector.broadcast %7 : vector<8x1xf32> to vector<8x64xf32>
    %9 = vector.broadcast %6 : vector<1x64xf32> to vector<8x64xf32>
    %10 = arith.mulf %8, %9 : vector<8x64xf32>
    %11 = arith.addf %3, %10 : vector<8x64xf32>
    %12 = vector.extract_strided_slice %2 {offsets = [0, 1], sizes = [1, 64], strides = [1, 1]} : vector<1x82xf32> to vector<1x64xf32>
    %c1 = arith.constant 1 : index
    %c0_6 = arith.constant 0 : index
    %13 = vector.load %arg3[%c1, %c0_6] : memref<3x64xf32, #tpu.memory_space<vmem>>, vector<1x64xf32>
    %14 = arith.mulf %12, %13 : vector<1x64xf32>
    %c0_7 = arith.constant 0 : index
    %c1_8 = arith.constant 1 : index
    %15 = vector.load %arg1[%c0_7, %c1_8] : memref<8x9xf32, #tpu.memory_space<vmem>>, vector<8x1xf32>
    %16 = vector.broadcast %15 : vector<8x1xf32> to vector<8x64xf32>
    %17 = vector.broadcast %14 : vector<1x64xf32> to vector<8x64xf32>
    %18 = arith.mulf %16, %17 : vector<8x64xf32>
    %19 = arith.addf %11, %18 : vector<8x64xf32>
    %20 = vector.extract_strided_slice %2 {offsets = [0, 2], sizes = [1, 64], strides = [1, 1]} : vector<1x82xf32> to vector<1x64xf32>
    %c2 = arith.constant 2 : index
    %c0_9 = arith.constant 0 : index
    %21 = vector.load %arg3[%c2, %c0_9] : memref<3x64xf32, #tpu.memory_space<vmem>>, vector<1x64xf32>
    %22 = arith.mulf %20, %21 : vector<1x64xf32>
    %c0_10 = arith.constant 0 : index
    %c2_11 = arith.constant 2 : index
    %23 = vector.load %arg1[%c0_10, %c2_11] : memref<8x9xf32, #tpu.memory_space<vmem>>, vector<8x1xf32>
    %24 = vector.broadcast %23 : vector<8x1xf32> to vector<8x64xf32>
    %25 = vector.broadcast %22 : vector<1x64xf32> to vector<8x64xf32>
    %26 = arith.mulf %24, %25 : vector<8x64xf32>
    %27 = arith.addf %19, %26 : vector<8x64xf32>
    %28 = vector.extract_strided_slice %2 {offsets = [0, 8], sizes = [1, 64], strides = [1, 1]} : vector<1x82xf32> to vector<1x64xf32>
    %c0_12 = arith.constant 0 : index
    %c0_13 = arith.constant 0 : index
    %29 = vector.load %arg3[%c0_12, %c0_13] : memref<3x64xf32, #tpu.memory_space<vmem>>, vector<1x64xf32>
    %30 = arith.mulf %28, %29 : vector<1x64xf32>
    %c0_14 = arith.constant 0 : index
    %c3 = arith.constant 3 : index
    %31 = vector.load %arg1[%c0_14, %c3] : memref<8x9xf32, #tpu.memory_space<vmem>>, vector<8x1xf32>
    %32 = vector.broadcast %31 : vector<8x1xf32> to vector<8x64xf32>
    %33 = vector.broadcast %30 : vector<1x64xf32> to vector<8x64xf32>
    %34 = arith.mulf %32, %33 : vector<8x64xf32>
    %35 = arith.addf %27, %34 : vector<8x64xf32>
    %36 = vector.extract_strided_slice %2 {offsets = [0, 9], sizes = [1, 64], strides = [1, 1]} : vector<1x82xf32> to vector<1x64xf32>
    %c1_15 = arith.constant 1 : index
    %c0_16 = arith.constant 0 : index
    %37 = vector.load %arg3[%c1_15, %c0_16] : memref<3x64xf32, #tpu.memory_space<vmem>>, vector<1x64xf32>
    %38 = arith.mulf %36, %37 : vector<1x64xf32>
    %c0_17 = arith.constant 0 : index
    %c4 = arith.constant 4 : index
    %39 = vector.load %arg1[%c0_17, %c4] : memref<8x9xf32, #tpu.memory_space<vmem>>, vector<8x1xf32>
    %40 = vector.broadcast %39 : vector<8x1xf32> to vector<8x64xf32>
    %41 = vector.broadcast %38 : vector<1x64xf32> to vector<8x64xf32>
    %42 = arith.mulf %40, %41 : vector<8x64xf32>
    %43 = arith.addf %35, %42 : vector<8x64xf32>
    %44 = vector.extract_strided_slice %2 {offsets = [0, 10], sizes = [1, 64], strides = [1, 1]} : vector<1x82xf32> to vector<1x64xf32>
    %c2_18 = arith.constant 2 : index
    %c0_19 = arith.constant 0 : index
    %45 = vector.load %arg3[%c2_18, %c0_19] : memref<3x64xf32, #tpu.memory_space<vmem>>, vector<1x64xf32>
    %46 = arith.mulf %44, %45 : vector<1x64xf32>
    %c0_20 = arith.constant 0 : index
    %c5 = arith.constant 5 : index
    %47 = vector.load %arg1[%c0_20, %c5] : memref<8x9xf32, #tpu.memory_space<vmem>>, vector<8x1xf32>
    %48 = vector.broadcast %47 : vector<8x1xf32> to vector<8x64xf32>
    %49 = vector.broadcast %46 : vector<1x64xf32> to vector<8x64xf32>
    %50 = arith.mulf %48, %49 : vector<8x64xf32>
    %51 = arith.addf %43, %50 : vector<8x64xf32>
    %52 = vector.extract_strided_slice %2 {offsets = [0, 16], sizes = [1, 64], strides = [1, 1]} : vector<1x82xf32> to vector<1x64xf32>
    %c0_21 = arith.constant 0 : index
    %c0_22 = arith.constant 0 : index
    %53 = vector.load %arg3[%c0_21, %c0_22] : memref<3x64xf32, #tpu.memory_space<vmem>>, vector<1x64xf32>
    %54 = arith.mulf %52, %53 : vector<1x64xf32>
    %c0_23 = arith.constant 0 : index
    %c6 = arith.constant 6 : index
    %55 = vector.load %arg1[%c0_23, %c6] : memref<8x9xf32, #tpu.memory_space<vmem>>, vector<8x1xf32>
    %56 = vector.broadcast %55 : vector<8x1xf32> to vector<8x64xf32>
    %57 = vector.broadcast %54 : vector<1x64xf32> to vector<8x64xf32>
    %58 = arith.mulf %56, %57 : vector<8x64xf32>
    %59 = arith.addf %51, %58 : vector<8x64xf32>
    %60 = vector.extract_strided_slice %2 {offsets = [0, 17], sizes = [1, 64], strides = [1, 1]} : vector<1x82xf32> to vector<1x64xf32>
    %c1_24 = arith.constant 1 : index
    %c0_25 = arith.constant 0 : index
    %61 = vector.load %arg3[%c1_24, %c0_25] : memref<3x64xf32, #tpu.memory_space<vmem>>, vector<1x64xf32>
    %62 = arith.mulf %60, %61 : vector<1x64xf32>
    %c0_26 = arith.constant 0 : index
    %c7 = arith.constant 7 : index
    %63 = vector.load %arg1[%c0_26, %c7] : memref<8x9xf32, #tpu.memory_space<vmem>>, vector<8x1xf32>
    %64 = vector.broadcast %63 : vector<8x1xf32> to vector<8x64xf32>
    %65 = vector.broadcast %62 : vector<1x64xf32> to vector<8x64xf32>
    %66 = arith.mulf %64, %65 : vector<8x64xf32>
    %67 = arith.addf %59, %66 : vector<8x64xf32>
    %68 = vector.extract_strided_slice %2 {offsets = [0, 18], sizes = [1, 64], strides = [1, 1]} : vector<1x82xf32> to vector<1x64xf32>
    %c2_27 = arith.constant 2 : index
    %c0_28 = arith.constant 0 : index
    %69 = vector.load %arg3[%c2_27, %c0_28] : memref<3x64xf32, #tpu.memory_space<vmem>>, vector<1x64xf32>
    %70 = arith.mulf %68, %69 : vector<1x64xf32>
    %c0_29 = arith.constant 0 : index
    %c8 = arith.constant 8 : index
    %71 = vector.load %arg1[%c0_29, %c8] : memref<8x9xf32, #tpu.memory_space<vmem>>, vector<8x1xf32>
    %72 = vector.broadcast %71 : vector<8x1xf32> to vector<8x64xf32>
    %73 = vector.broadcast %70 : vector<1x64xf32> to vector<8x64xf32>
    %74 = arith.mulf %72, %73 : vector<8x64xf32>
    %75 = arith.addf %67, %74 : vector<8x64xf32>
    %c0_30 = arith.constant 0 : index
    %c0_31 = arith.constant 0 : index
    %76 = vector.load %arg2[%c0_30, %c0_31] : memref<8x1xf32, #tpu.memory_space<vmem>>, vector<8x1xf32>
    %77 = vector.broadcast %76 : vector<8x1xf32> to vector<8x64xf32>
    %78 = arith.addf %75, %77 : vector<8x64xf32>
    %cst_32 = arith.constant 0.000000e+00 : f32
    %79 = vector.broadcast %cst_32 : f32 to vector<8x9xf32>
    %80 = tpu.concatenate %79, %78, %79 in 1 : vector<8x9xf32>, vector<8x64xf32>, vector<8x9xf32> -> vector<8x82xf32>
    %81 = vector.extract_strided_slice %80 {offsets = [0, 0], sizes = [8, 64], strides = [1, 1]} : vector<8x82xf32> to vector<8x64xf32>
    %c0_33 = arith.constant 0 : index
    %c0_34 = arith.constant 0 : index
    %82 = vector.load %arg3[%c0_33, %c0_34] : memref<3x64xf32, #tpu.memory_space<vmem>>, vector<1x64xf32>
    %83 = vector.broadcast %82 : vector<1x64xf32> to vector<8x64xf32>
    %84 = arith.mulf %81, %83 : vector<8x64xf32>
    %85 = vector.extract_strided_slice %80 {offsets = [0, 1], sizes = [8, 64], strides = [1, 1]} : vector<8x82xf32> to vector<8x64xf32>
    %c1_35 = arith.constant 1 : index
    %c0_36 = arith.constant 0 : index
    %86 = vector.load %arg3[%c1_35, %c0_36] : memref<3x64xf32, #tpu.memory_space<vmem>>, vector<1x64xf32>
    %87 = vector.broadcast %86 : vector<1x64xf32> to vector<8x64xf32>
    %88 = arith.mulf %85, %87 : vector<8x64xf32>
    %89 = vector.extract_strided_slice %80 {offsets = [0, 2], sizes = [8, 64], strides = [1, 1]} : vector<8x82xf32> to vector<8x64xf32>
    %c2_37 = arith.constant 2 : index
    %c0_38 = arith.constant 0 : index
    %90 = vector.load %arg3[%c2_37, %c0_38] : memref<3x64xf32, #tpu.memory_space<vmem>>, vector<1x64xf32>
    %91 = vector.broadcast %90 : vector<1x64xf32> to vector<8x64xf32>
    %92 = arith.mulf %89, %91 : vector<8x64xf32>
    %93 = vector.extract_strided_slice %80 {offsets = [0, 8], sizes = [8, 64], strides = [1, 1]} : vector<8x82xf32> to vector<8x64xf32>
    %c0_39 = arith.constant 0 : index
    %c0_40 = arith.constant 0 : index
    %94 = vector.load %arg3[%c0_39, %c0_40] : memref<3x64xf32, #tpu.memory_space<vmem>>, vector<1x64xf32>
    %95 = vector.broadcast %94 : vector<1x64xf32> to vector<8x64xf32>
    %96 = arith.mulf %93, %95 : vector<8x64xf32>
    %97 = vector.extract_strided_slice %80 {offsets = [0, 9], sizes = [8, 64], strides = [1, 1]} : vector<8x82xf32> to vector<8x64xf32>
    %c1_41 = arith.constant 1 : index
    %c0_42 = arith.constant 0 : index
    %98 = vector.load %arg3[%c1_41, %c0_42] : memref<3x64xf32, #tpu.memory_space<vmem>>, vector<1x64xf32>
    %99 = vector.broadcast %98 : vector<1x64xf32> to vector<8x64xf32>
    %100 = arith.mulf %97, %99 : vector<8x64xf32>
    %101 = vector.extract_strided_slice %80 {offsets = [0, 10], sizes = [8, 64], strides = [1, 1]} : vector<8x82xf32> to vector<8x64xf32>
    %c2_43 = arith.constant 2 : index
    %c0_44 = arith.constant 0 : index
    %102 = vector.load %arg3[%c2_43, %c0_44] : memref<3x64xf32, #tpu.memory_space<vmem>>, vector<1x64xf32>
    %103 = vector.broadcast %102 : vector<1x64xf32> to vector<8x64xf32>
    %104 = arith.mulf %101, %103 : vector<8x64xf32>
    %105 = vector.extract_strided_slice %80 {offsets = [0, 16], sizes = [8, 64], strides = [1, 1]} : vector<8x82xf32> to vector<8x64xf32>
    %c0_45 = arith.constant 0 : index
    %c0_46 = arith.constant 0 : index
    %106 = vector.load %arg3[%c0_45, %c0_46] : memref<3x64xf32, #tpu.memory_space<vmem>>, vector<1x64xf32>
    %107 = vector.broadcast %106 : vector<1x64xf32> to vector<8x64xf32>
    %108 = arith.mulf %105, %107 : vector<8x64xf32>
    %109 = vector.extract_strided_slice %80 {offsets = [0, 17], sizes = [8, 64], strides = [1, 1]} : vector<8x82xf32> to vector<8x64xf32>
    %c1_47 = arith.constant 1 : index
    %c0_48 = arith.constant 0 : index
    %110 = vector.load %arg3[%c1_47, %c0_48] : memref<3x64xf32, #tpu.memory_space<vmem>>, vector<1x64xf32>
    %111 = vector.broadcast %110 : vector<1x64xf32> to vector<8x64xf32>
    %112 = arith.mulf %109, %111 : vector<8x64xf32>
    %113 = vector.extract_strided_slice %80 {offsets = [0, 18], sizes = [8, 64], strides = [1, 1]} : vector<8x82xf32> to vector<8x64xf32>
    %c2_49 = arith.constant 2 : index
    %c0_50 = arith.constant 0 : index
    %114 = vector.load %arg3[%c2_49, %c0_50] : memref<3x64xf32, #tpu.memory_space<vmem>>, vector<1x64xf32>
    %115 = vector.broadcast %114 : vector<1x64xf32> to vector<8x64xf32>
    %116 = arith.mulf %113, %115 : vector<8x64xf32>
    %117 = tpu.concatenate %84, %88, %92, %96, %100, %104, %108, %112, %116 in 0 : vector<8x64xf32>, vector<8x64xf32>, vector<8x64xf32>, vector<8x64xf32>, vector<8x64xf32>, vector<8x64xf32>, vector<8x64xf32>, vector<8x64xf32>, vector<8x64xf32> -> vector<72x64xf32>
    %118 = arith.truncf %117 : vector<72x64xf32> to vector<72x64xbf16>
    %c0_51 = arith.constant 0 : index
    %c0_52 = arith.constant 0 : index
    %119 = vector.load %arg4[%c0_51, %c0_52] : memref<12x72xbf16, #tpu.memory_space<vmem>>, vector<12x72xbf16>
    %cst_53 = arith.constant dense<0.000000e+00> : vector<12x64xf32>
    %120 = tpu.matmul %119, %118, %cst_53 {dimension_numbers = #tpu.dot_dimension_numbers<[1], [0], [0], [1], [0, 0, 1, 1], [], []>} : vector<12x72xbf16>, vector<72x64xbf16>, vector<12x64xf32> -> vector<12x64xf32>
    %c0_54 = arith.constant 0 : index
    %c0_55 = arith.constant 0 : index
    %121 = vector.load %arg5[%c0_54, %c0_55] : memref<12x1xf32, #tpu.memory_space<vmem>>, vector<12x1xf32>
    %122 = vector.broadcast %121 : vector<12x1xf32> to vector<12x64xf32>
    %123 = arith.addf %120, %122 : vector<12x64xf32>
    %124 = vector.extract_strided_slice %123 {offsets = [0, 0], sizes = [1, 64], strides = [1, 1]} : vector<12x64xf32> to vector<1x64xf32>
    %125 = vector.extract_strided_slice %123 {offsets = [1, 0], sizes = [1, 64], strides = [1, 1]} : vector<12x64xf32> to vector<1x64xf32>
    %126 = vector.extract_strided_slice %123 {offsets = [2, 0], sizes = [1, 64], strides = [1, 1]} : vector<12x64xf32> to vector<1x64xf32>
    %127 = vector.extract_strided_slice %123 {offsets = [3, 0], sizes = [1, 64], strides = [1, 1]} : vector<12x64xf32> to vector<1x64xf32>
    %128 = vector.extract_strided_slice %123 {offsets = [4, 0], sizes = [1, 64], strides = [1, 1]} : vector<12x64xf32> to vector<1x64xf32>
    %129 = vector.extract_strided_slice %123 {offsets = [5, 0], sizes = [1, 64], strides = [1, 1]} : vector<12x64xf32> to vector<1x64xf32>
    %130 = vector.extract_strided_slice %123 {offsets = [6, 0], sizes = [1, 64], strides = [1, 1]} : vector<12x64xf32> to vector<1x64xf32>
    %131 = vector.extract_strided_slice %123 {offsets = [7, 0], sizes = [1, 64], strides = [1, 1]} : vector<12x64xf32> to vector<1x64xf32>
    %132 = vector.extract_strided_slice %123 {offsets = [8, 0], sizes = [1, 64], strides = [1, 1]} : vector<12x64xf32> to vector<1x64xf32>
    %133 = vector.extract_strided_slice %123 {offsets = [9, 0], sizes = [1, 64], strides = [1, 1]} : vector<12x64xf32> to vector<1x64xf32>
    %134 = vector.extract_strided_slice %123 {offsets = [10, 0], sizes = [1, 64], strides = [1, 1]} : vector<12x64xf32> to vector<1x64xf32>
    %135 = vector.extract_strided_slice %123 {offsets = [11, 0], sizes = [1, 64], strides = [1, 1]} : vector<12x64xf32> to vector<1x64xf32>
    %c0_56 = arith.constant 0 : index
    %c0_57 = arith.constant 0 : index
    %136 = vector.load %arg6[%c0_56, %c0_57] : memref<1x128xf32, #tpu.memory_space<vmem>>, vector<1x128xf32>
    %137 = tpu.concatenate %124, %125, %126, %127, %128, %129, %130, %131, %132, %133, %134, %135, %136 in 1 : vector<1x64xf32>, vector<1x64xf32>, vector<1x64xf32>, vector<1x64xf32>, vector<1x64xf32>, vector<1x64xf32>, vector<1x64xf32>, vector<1x64xf32>, vector<1x64xf32>, vector<1x64xf32>, vector<1x64xf32>, vector<1x64xf32>, vector<1x128xf32> -> vector<1x896xf32>
    %138 = arith.truncf %137 : vector<1x896xf32> to vector<1x896xbf16>
    %c0_58 = arith.constant 0 : index
    %c0_59 = arith.constant 0 : index
    %139 = vector.load %arg8[%c0_58, %c0_59] : memref<896x512xbf16, #tpu.memory_space<vmem>>, vector<896x512xbf16>
    %cst_60 = arith.constant dense<0.000000e+00> : vector<1x512xf32>
    %140 = tpu.matmul %138, %139, %cst_60 {dimension_numbers = #tpu.dot_dimension_numbers<[1], [0], [0], [1], [0, 0, 1, 1], [], []>} : vector<1x896xbf16>, vector<896x512xbf16>, vector<1x512xf32> -> vector<1x512xf32>
    %c0_61 = arith.constant 0 : index
    %c0_62 = arith.constant 0 : index
    %141 = vector.load %arg9[%c0_61, %c0_62] : memref<1x512xf32, #tpu.memory_space<vmem>>, vector<1x512xf32>
    %142 = arith.addf %140, %141 : vector<1x512xf32>
    %143 = vector.extract_strided_slice %142 {offsets = [0, 0], sizes = [1, 128], strides = [1, 1]} : vector<1x512xf32> to vector<1x128xf32>
    %cst_63 = arith.constant 0.000000e+00 : f32
    %144 = vector.broadcast %cst_63 : f32 to vector<1x128xf32>
    %145 = arith.subf %144, %143 : vector<1x128xf32>
    %146 = math.exp %145 : vector<1x128xf32>
    %cst_64 = arith.constant 1.000000e+00 : f32
    %147 = vector.broadcast %cst_64 : f32 to vector<1x128xf32>
    %148 = arith.addf %147, %146 : vector<1x128xf32>
    %cst_65 = arith.constant 1.000000e+00 : f32
    %149 = vector.broadcast %cst_65 : f32 to vector<1x128xf32>
    %150 = arith.divf %149, %148 : vector<1x128xf32>
    %151 = vector.extract_strided_slice %142 {offsets = [0, 128], sizes = [1, 128], strides = [1, 1]} : vector<1x512xf32> to vector<1x128xf32>
    %cst_66 = arith.constant 0.000000e+00 : f32
    %152 = vector.broadcast %cst_66 : f32 to vector<1x128xf32>
    %153 = arith.subf %152, %151 : vector<1x128xf32>
    %154 = math.exp %153 : vector<1x128xf32>
    %cst_67 = arith.constant 1.000000e+00 : f32
    %155 = vector.broadcast %cst_67 : f32 to vector<1x128xf32>
    %156 = arith.addf %155, %154 : vector<1x128xf32>
    %cst_68 = arith.constant 1.000000e+00 : f32
    %157 = vector.broadcast %cst_68 : f32 to vector<1x128xf32>
    %158 = arith.divf %157, %156 : vector<1x128xf32>
    %159 = vector.extract_strided_slice %142 {offsets = [0, 256], sizes = [1, 128], strides = [1, 1]} : vector<1x512xf32> to vector<1x128xf32>
    %160 = math.tanh %159 : vector<1x128xf32>
    %161 = vector.extract_strided_slice %142 {offsets = [0, 384], sizes = [1, 128], strides = [1, 1]} : vector<1x512xf32> to vector<1x128xf32>
    %cst_69 = arith.constant 0.000000e+00 : f32
    %162 = vector.broadcast %cst_69 : f32 to vector<1x128xf32>
    %163 = arith.subf %162, %161 : vector<1x128xf32>
    %164 = math.exp %163 : vector<1x128xf32>
    %cst_70 = arith.constant 1.000000e+00 : f32
    %165 = vector.broadcast %cst_70 : f32 to vector<1x128xf32>
    %166 = arith.addf %165, %164 : vector<1x128xf32>
    %cst_71 = arith.constant 1.000000e+00 : f32
    %167 = vector.broadcast %cst_71 : f32 to vector<1x128xf32>
    %168 = arith.divf %167, %166 : vector<1x128xf32>
    %c0_72 = arith.constant 0 : index
    %c0_73 = arith.constant 0 : index
    %169 = vector.load %arg7[%c0_72, %c0_73] : memref<1x128xf32, #tpu.memory_space<vmem>>, vector<1x128xf32>
    %170 = arith.mulf %158, %169 : vector<1x128xf32>
    %171 = arith.mulf %150, %160 : vector<1x128xf32>
    %172 = arith.addf %170, %171 : vector<1x128xf32>
    %173 = math.tanh %172 : vector<1x128xf32>
    %174 = arith.mulf %168, %173 : vector<1x128xf32>
    %175 = arith.truncf %174 : vector<1x128xf32> to vector<1x128xbf16>
    %c0_74 = arith.constant 0 : index
    %c0_75 = arith.constant 0 : index
    %176 = vector.load %arg10[%c0_74, %c0_75] : memref<128x4xbf16, #tpu.memory_space<vmem>>, vector<128x4xbf16>
    %cst_76 = arith.constant dense<0.000000e+00> : vector<1x4xf32>
    %177 = tpu.matmul %175, %176, %cst_76 {dimension_numbers = #tpu.dot_dimension_numbers<[1], [0], [0], [1], [0, 0, 1, 1], [], []>} : vector<1x128xbf16>, vector<128x4xbf16>, vector<1x4xf32> -> vector<1x4xf32>
    %c0_77 = arith.constant 0 : index
    %c0_78 = arith.constant 0 : index
    %178 = vector.load %arg11[%c0_77, %c0_78] : memref<1x4xf32, #tpu.memory_space<vmem>>, vector<1x4xf32>
    %179 = arith.addf %177, %178 : vector<1x4xf32>
    %c0_79 = arith.constant 0 : index
    %c0_80 = arith.constant 0 : index
    %180 = vector.load %arg12[%c0_79, %c0_80] : memref<1x4xf32, #tpu.memory_space<vmem>>, vector<1x4xf32>
    tpu.vector_store %arg12[%c0_79, %c0_80], %179 {strides = array<i32>} : memref<1x4xf32, #tpu.memory_space<vmem>>, vector<1x4xf32>,
    %c0_81 = arith.constant 0 : index
    %c0_82 = arith.constant 0 : index
    %181 = vector.load %arg13[%c0_81, %c0_82] : memref<1x128xf32, #tpu.memory_space<vmem>>, vector<1x128xf32>
    tpu.vector_store %arg13[%c0_81, %c0_82], %174 {strides = array<i32>} : memref<1x128xf32, #tpu.memory_space<vmem>>, vector<1x128xf32>,
    %c0_83 = arith.constant 0 : index
    %c0_84 = arith.constant 0 : index
    %182 = vector.load %arg14[%c0_83, %c0_84] : memref<1x128xf32, #tpu.memory_space<vmem>>, vector<1x128xf32>
    tpu.vector_store %arg14[%c0_83, %c0_84], %172 {strides = array<i32>} : memref<1x128xf32, #tpu.memory_space<vmem>>, vector<1x128xf32>,
    return
  }
}

</mosaic_0001>

<llo_original>
// kernel: tpu_custom_call.1
$region0: #{tpu_custom_call.1}
  #allocation0 [shape = 'u32[]', space=smem, size = 0x4, offset = 0x4, fixed_abs, tag = 'smem constant byte address 0x4 - core index']
  #allocation1 [shape = 'u32[144,128]{1,0:T(1,128)}', space=vmem, size = 0x12000, scoped, tag = 'internal scratch']
  %s0 = inlined_call_operand.vmem [shape: f32[1,64], index: 0, kind: input, shape index: {}]
  %s1 = inlined_call_operand.vmem [shape: f32[8,9], index: 1, kind: input, shape index: {}]
  %s2 = inlined_call_operand.vmem [shape: f32[8,1], index: 2, kind: input, shape index: {}]
  %s3 = inlined_call_operand.vmem [shape: f32[3,64], index: 3, kind: input, shape index: {}]
  %s4 = inlined_call_operand.vmem [shape: bf16[12,72], index: 4, kind: input, shape index: {}]
  %s5 = inlined_call_operand.vmem [shape: f32[12,1], index: 5, kind: input, shape index: {}]
  %s6 = inlined_call_operand.vmem [shape: f32[1,128], index: 6, kind: input, shape index: {}]
  %s7 = inlined_call_operand.vmem [shape: f32[1,128], index: 7, kind: input, shape index: {}]
  %s8 = inlined_call_operand.hbm [shape: bf16[896,512], index: 8, kind: input, shape index: {}]
  %s9 = inlined_call_operand.vmem [shape: f32[1,512], index: 9, kind: input, shape index: {}]
  %s10 = inlined_call_operand.vmem [shape: bf16[128,4], index: 10, kind: input, shape index: {}]
  %s11 = inlined_call_operand.vmem [shape: f32[1,4], index: 11, kind: input, shape index: {}]
  %s12 = inlined_call_operand.hbm [shape: f32[1,4], index: 12, kind: output, shape index: {0}]
  %s13 = inlined_call_operand.hbm [shape: f32[1,128], index: 13, kind: output, shape index: {1}]
  %s14 = inlined_call_operand.hbm [shape: f32[1,128], index: 14, kind: output, shape index: {2}]
  %15 = xla_tuple %s12, %s13, %s14
  %s16 = sld [smem:[#allocation0]]
  $region78: #{tpu_custom_call.1} parent=0
    _
  %s18 = ssub.s32 1, %s16
  %s19 = scalar_select 0, %s18, %s16
  $region1: #{tpu_custom_call.1} parent=0
    #allocation2 [shape = 'u8[917504]{0}', space=vmem, size = 0xe0000, scoped, tag = 'input window, operand 8, single buffered']
    #allocation3 [shape = 's32[1]{0}', space=sflag, size = 0x4, scoped, tag = 'scoped memory for tpu_custom_call.1']
    #allocation4 [shape = 's32[1]{0}', space=sflag, size = 0x4, scoped, tag = 'scoped memory for tpu_custom_call.1']
    #allocation5 [shape = 'u8[512]{0}', space=vmem, size = 0x400, scoped, tag = 'output window, operand 0, single buffered']
    #allocation6 [shape = 'u8[512]{0}', space=vmem, size = 0x400, scoped, tag = 'output window, operand 1, single buffered']
    #allocation7 [shape = 's32[1]{0}', space=sflag, size = 0x4, scoped, tag = 'scoped memory for tpu_custom_call.1']
    #allocation8 [shape = 'u8[512]{0}', space=vmem, size = 0x400, scoped, tag = 'output window, operand 2, single buffered']
    %20 = vsyncpa [#allocation3], 0
    %21 = vsyncpa [#allocation4], 0
    %22 = vsyncpa [#allocation7], 0
    // Predicated region
    $region2: #{tpu_custom_call.1} parent=1 // pred_check
      _
    $region3: #{tpu_custom_call.1} parent=1 // pred_check_branch
      %24 = sbr.rel (0) target = $region5
    $region4: #{tpu_custom_call.1} parent=1 // pred_region
      _
    $region5: #{tpu_custom_call.1} parent=1 // pred_fallthru
      _
    // Predicated region
    $region6: #{tpu_custom_call.1} parent=1 // pred_check
      _
    $region7: #{tpu_custom_call.1} parent=1 // pred_check_branch
      %26 = sbr.rel (0) target = $region9
    $region8: #{tpu_custom_call.1} parent=1 // pred_region
      _
    $region9: #{tpu_custom_call.1} parent=1 // pred_fallthru
      _
    // Predicated region
    $region10: #{tpu_custom_call.1} parent=1 // pred_check
      _
    $region11: #{tpu_custom_call.1} parent=1 // pred_check_branch
      %28 = sbr.rel (0) target = $region13
    $region12: #{tpu_custom_call.1} parent=1 // pred_region
      _
    $region13: #{tpu_custom_call.1} parent=1 // pred_fallthru
      _
    // Predicated region
    $region14: #{tpu_custom_call.1} parent=1 // pred_check
      _
    $region15: #{tpu_custom_call.1} parent=1 // pred_check_branch
      %30 = sbr.rel (0) target = $region17
    $region16: #{tpu_custom_call.1} parent=1 // pred_region
      _
    $region17: #{tpu_custom_call.1} parent=1 // pred_fallthru
      _
    // Predicated region
    $region18: #{tpu_custom_call.1} parent=1 // pred_check
      _
    $region19: #{tpu_custom_call.1} parent=1 // pred_check_branch
      %32 = sbr.rel (0) target = $region21
    $region20: #{tpu_custom_call.1} parent=1 // pred_region
      _
    $region21: #{tpu_custom_call.1} parent=1 // pred_fallthru
      _
    // Predicated region
    $region22: #{tpu_custom_call.1} parent=1 // pred_check
      _
    $region23: #{tpu_custom_call.1} parent=1 // pred_check_branch
      %34 = sbr.rel (0) target = $region25
    $region24: #{tpu_custom_call.1} parent=1 // pred_region
      _
    $region25: #{tpu_custom_call.1} parent=1 // pred_fallthru
      _
    // Predicated region
    $region26: #{tpu_custom_call.1} parent=1 // pred_check
      _
    $region27: #{tpu_custom_call.1} parent=1 // pred_check_branch
      %36 = sbr.rel (0) target = $region29
    $region28: #{tpu_custom_call.1} parent=1 // pred_region
      _
    $region29: #{tpu_custom_call.1} parent=1 // pred_fallthru
      _
    // Predicated region
    $region30: #{tpu_custom_call.1} parent=1 // pred_check
      _
    $region31: #{tpu_custom_call.1} parent=1 // pred_check_branch
      %38 = sbr.rel (0) target = $region33
    $region32: #{tpu_custom_call.1} parent=1 // pred_region
      _
    $region33: #{tpu_custom_call.1} parent=1 // pred_fallthru
      _
    // Predicated region
    $region34: #{tpu_custom_call.1} parent=1 // pred_check
      _
    $region35: #{tpu_custom_call.1} parent=1 // pred_check_branch
      %40 = sbr.rel (0) target = $region37
    $region36: #{tpu_custom_call.1} parent=1 // pred_region
      %s42 = ssub.s32 28672, 28672
      %43 = vsyncadd [#allocation3], %s42
      %s44 = sshll.u32 [#allocation2], 4
      %s45 = int_to_ptr.vmem [resolvable:$true] %s44
      %50 = dma.hbm_to_vmem [thread:$0]  %s8, 28672, %s45, [#allocation3], 256, 256, 16
    $region37: #{tpu_custom_call.1} parent=1 // pred_fallthru
      _
    // Predicated region
    $region38: #{tpu_custom_call.1} parent=1 // pred_check
      _
    $region39: #{tpu_custom_call.1} parent=1 // pred_check_branch
      %52 = sbr.rel (0) target = $region41
    $region40: #{tpu_custom_call.1} parent=1 // pred_region
      _
    $region41: #{tpu_custom_call.1} parent=1 // pred_fallthru
      _
    // Predicated region
    $region42: #{tpu_custom_call.1} parent=1 // pred_check
      _
    $region43: #{tpu_custom_call.1} parent=1 // pred_check_branch
      %54 = sbr.rel (0) target = $region45
    $region44: #{tpu_custom_call.1} parent=1 // pred_region
      _
    $region45: #{tpu_custom_call.1} parent=1 // pred_fallthru
      _
    // Predicated region
    $region46: #{tpu_custom_call.1} parent=1 // pred_check
      _
    $region47: #{tpu_custom_call.1} parent=1 // pred_check_branch
      %56 = sbr.rel (0) target = $region49
    $region48: #{tpu_custom_call.1} parent=1 // pred_region
      _
    $region49: #{tpu_custom_call.1} parent=1 // pred_fallthru
      _
    // Predicated region
    $region50: #{tpu_custom_call.1} parent=1 // pred_check
      _
    $region51: #{tpu_custom_call.1} parent=1 // pred_check_branch
      %58 = sbr.rel (0) target = $region53
    $region52: #{tpu_custom_call.1} parent=1 // pred_region
      %59 = dma.done [#allocation3], 28672
    $region53: #{tpu_custom_call.1} parent=1 // pred_fallthru
      _
    %v61 = vld [vmem:[%s0] sm:$0x1]
    %v63 = vlaneseq
    %v64 = vshrl.u32 %v63, 7
    %v65 = vsub.s32 0, %v64
    %v66 = vrot.slane %v61, %v65
    %67 = vrot.lane.b32.xlu0 %v66, 9
    %v68 = vpop.permute.xlu0 %67
    %vm70 = vcmask 72704
    %v71 = vsel %vm70, 0.0, %v68
    %vm72 = vcmask 596992
    %v73 = vsel %vm72, %v71, 0.0
    %v74 = vld [vmem:[%s3] sm:$0x1]
    %v75 = vmul.f32 %v73, %v74
    %v76 = vld [vmem:[%s1] sm:$0xff]
    %78 = vset.pattern.permute.xlu0 0
    %79 = vperm.xlu0 %78, %v76
    %v80 = vpop.permute.xlu0 %79
    %v82 = vlaneseq
    %v83 = vshrl.u32 %v82, 7
    %v84 = vsub.s32 0, %v83
    %v85 = vrot.slane %v75, %v84
    %v86 = vmul.f32 %v80, %v85
    %v87 = vadd.f32 %v86, 0.0
    %v88 = vld [vmem:[%s3 + $0x1] sm:$0x1]
    %90 = vrot.lane.b32.xlu0 %v88, 1
    %v91 = vpop.permute.xlu0 %90
    %v93 = vmul.f32 %v73, %v91
    %94 = vset.pattern.permute.xlu0 1
    %95 = vperm.xlu0 %94, %v76
    %v96 = vpop.permute.xlu0 %95
    %v98 = vlaneseq
    %v99 = vshrl.u32 %v98, 7
    %v100 = vsub.s32 0, %v99
    %v101 = vrot.slane %v93, %v100
    %v102 = vmul.f32 %v96, %v101
    %104 = vrot.lane.b32.xlu0 %v102, 127
    %v105 = vpop.permute.xlu0 %104
    %v107 = vadd.f32 %v87, %v105
    %v108 = vld [vmem:[%s3 + $0x2] sm:$0x1]
    %110 = vrot.lane.b32.xlu0 %v108, 2
    %v111 = vpop.permute.xlu0 %110
    %v113 = vmul.f32 %v73, %v111
    %114 = vset.pattern.permute.xlu0 2
    %115 = vperm.xlu0 %114, %v76
    %v116 = vpop.permute.xlu0 %115
    %v118 = vlaneseq
    %v119 = vshrl.u32 %v118, 7
    %v120 = vsub.s32 0, %v119
    %v121 = vrot.slane %v113, %v120
    %v122 = vmul.f32 %v116, %v121
    %124 = vrot.lane.b32.xlu0 %v122, 126
    %v125 = vpop.permute.xlu0 %124
    %v127 = vadd.f32 %v107, %v125
    %129 = vrot.lane.b32.xlu0 %v74, 8
    %v130 = vpop.permute.xlu0 %129
    %v132 = vmul.f32 %v73, %v130
    %133 = vset.pattern.permute.xlu0 3
    %134 = vperm.xlu0 %133, %v76
    %v135 = vpop.permute.xlu0 %134
    %v137 = vlaneseq
    %v138 = vshrl.u32 %v137, 7
    %v139 = vsub.s32 0, %v138
    %v140 = vrot.slane %v132, %v139
    %v141 = vmul.f32 %v135, %v140
    %143 = vrot.lane.b32.xlu0 %v141, 120
    %v144 = vpop.permute.xlu0 %143
    %v146 = vadd.f32 %v127, %v144
    %147 = vrot.lane.b32.xlu0 %v88, 9
    %v148 = vpop.permute.xlu0 %147
    %v150 = vmul.f32 %v73, %v148
    %151 = vset.pattern.permute.xlu0 4
    %152 = vperm.xlu0 %151, %v76
    %v153 = vpop.permute.xlu0 %152
    %v155 = vlaneseq
    %v156 = vshrl.u32 %v155, 7
    %v157 = vsub.s32 0, %v156
    %v158 = vrot.slane %v150, %v157
    %v159 = vmul.f32 %v153, %v158
    %161 = vrot.lane.b32.xlu0 %v159, 119
    %v162 = vpop.permute.xlu0 %161
    %v164 = vadd.f32 %v146, %v162
    %165 = vrot.lane.b32.xlu0 %v108, 10
    %v166 = vpop.permute.xlu0 %165
    %v168 = vmul.f32 %v73, %v166
    %169 = vset.pattern.permute.xlu0 5
    %170 = vperm.xlu0 %169, %v76
    %v171 = vpop.permute.xlu0 %170
    %v173 = vlaneseq
    %v174 = vshrl.u32 %v173, 7
    %v175 = vsub.s32 0, %v174
    %v176 = vrot.slane %v168, %v175
    %v177 = vmul.f32 %v171, %v176
    %179 = vrot.lane.b32.xlu0 %v177, 118
    %v180 = vpop.permute.xlu0 %179
    %v182 = vadd.f32 %v164, %v180
    %183 = vrot.lane.b32.xlu0 %v74, 16
    %v184 = vpop.permute.xlu0 %183
    %v186 = vmul.f32 %v73, %v184
    %187 = vset.pattern.permute.xlu0 6
    %188 = vperm.xlu0 %187, %v76
    %v189 = vpop.permute.xlu0 %188
    %v191 = vlaneseq
    %v192 = vshrl.u32 %v191, 7
    %v193 = vsub.s32 0, %v192
    %v194 = vrot.slane %v186, %v193
    %v195 = vmul.f32 %v189, %v194
    %197 = vrot.lane.b32.xlu0 %v195, 112
    %v198 = vpop.permute.xlu0 %197
    %v200 = vadd.f32 %v182, %v198
    %201 = vrot.lane.b32.xlu0 %v88, 17
    %v202 = vpop.permute.xlu0 %201
    %v204 = vmul.f32 %v73, %v202
    %205 = vset.pattern.permute.xlu0 7
    %206 = vperm.xlu0 %205, %v76
    %v207 = vpop.permute.xlu0 %206
    %v209 = vlaneseq
    %v210 = vshrl.u32 %v209, 7
    %v211 = vsub.s32 0, %v210
    %v212 = vrot.slane %v204, %v211
    %v213 = vmul.f32 %v207, %v212
    %215 = vrot.lane.b32.xlu0 %v213, 111
    %v216 = vpop.permute.xlu0 %215
    %v218 = vadd.f32 %v200, %v216
    %219 = vrot.lane.b32.xlu0 %v108, 18
    %v220 = vpop.permute.xlu0 %219
    %v222 = vmul.f32 %v73, %v220
    %223 = vset.pattern.permute.xlu0 8
    %224 = vperm.xlu0 %223, %v76
    %v225 = vpop.permute.xlu0 %224
    %v227 = vlaneseq
    %v228 = vshrl.u32 %v227, 7
    %v229 = vsub.s32 0, %v228
    %v230 = vrot.slane %v222, %v229
    %v231 = vmul.f32 %v225, %v230
    %233 = vrot.lane.b32.xlu0 %v231, 110
    %v234 = vpop.permute.xlu0 %233
    %v236 = vadd.f32 %v218, %v234
    %v237 = vld [vmem:[%s2] sm:$0xff]
    %239 = vset.pattern.permute.xlu0 0
    %240 = vperm.xlu0 %239, %v237
    %v241 = vpop.permute.xlu0 %240
    %v243 = vadd.f32 %v236, %v241
    %245 = vrot.lane.b32.xlu0 %v243, 9
    %v246 = vpop.permute.xlu0 %245
    %v248 = vsel %vm70, 0.0, %v246
    %v249 = vsel %vm72, %v248, 0.0
    %v250 = vlaneseq
    %v251 = vshrl.u32 %v250, 7
    %v252 = vsub.s32 0, %v251
    %v253 = vrot.slane %v74, %v252
    %v254 = vmul.f32 %v249, %v253
    %v255 = vlaneseq
    %v256 = vshrl.u32 %v255, 7
    %v257 = vsub.s32 0, %v256
    %v258 = vrot.slane %v88, %v257
    %260 = vrot.lane.b32.xlu0 %v258, 1
    %v261 = vpop.permute.xlu0 %260
    %v263 = vmul.f32 %v249, %v261
    %v264 = vlaneseq
    %v265 = vshrl.u32 %v264, 7
    %v266 = vsub.s32 0, %v265
    %v267 = vrot.slane %v108, %v266
    %269 = vrot.lane.b32.xlu0 %v267, 2
    %v270 = vpop.permute.xlu0 %269
    %v272 = vmul.f32 %v249, %v270
    %274 = vrot.lane.b32.xlu0 %v253, 8
    %v275 = vpop.permute.xlu0 %274
    %v277 = vmul.f32 %v249, %v275
    %278 = vrot.lane.b32.xlu0 %v258, 9
    %v279 = vpop.permute.xlu0 %278
    %v281 = vmul.f32 %v249, %v279
    %282 = vrot.lane.b32.xlu0 %v267, 10
    %v283 = vpop.permute.xlu0 %282
    %v285 = vmul.f32 %v249, %v283
    %286 = vrot.lane.b32.xlu0 %v253, 16
    %v287 = vpop.permute.xlu0 %286
    %v289 = vmul.f32 %v249, %v287
    %290 = vrot.lane.b32.xlu0 %v258, 17
    %v291 = vpop.permute.xlu0 %290
    %v293 = vmul.f32 %v249, %v291
    %294 = vrot.lane.b32.xlu0 %v267, 18
    %v295 = vpop.permute.xlu0 %294
    %v297 = vmul.f32 %v249, %v295
    %299 = vrot.lane.b32.xlu0 %v263, 127
    %v300 = vpop.permute.xlu0 %299
    %303 = vrot.lane.b32.xlu0 %v272, 126
    %v304 = vpop.permute.xlu0 %303
    %307 = vrot.lane.b32.xlu0 %v277, 120
    %v308 = vpop.permute.xlu0 %307
    %311 = vrot.lane.b32.xlu0 %v281, 119
    %v312 = vpop.permute.xlu0 %311
    %315 = vrot.lane.b32.xlu0 %v285, 118
    %v316 = vpop.permute.xlu0 %315
    %319 = vrot.lane.b32.xlu0 %v289, 112
    %v320 = vpop.permute.xlu0 %319
    %323 = vrot.lane.b32.xlu0 %v293, 111
    %v324 = vpop.permute.xlu0 %323
    %327 = vrot.lane.b32.xlu0 %v297, 110
    %v328 = vpop.permute.xlu0 %327
    %v330 = vpack.c.bf16 %v300, %v254
    %v331 = vpack.c.bf16 %v308, %v304
    %v332 = vpack.c.bf16 %v316, %v312
    %v333 = vpack.c.bf16 %v324, %v320
    %v334 = vpack.c.bf16 %v328, %v328
    %v335 = vld [vmem:[%s4] sm:$0xf]
    %v336 = vld [vmem:[%s4 + $0x4] sm:$0x3]
    %v337 = vld [vmem:[%s5] sm:$0xff]
    %v338 = vld [vmem:[%s5 + $0x8] sm:$0xf]
    %340 = vset.pattern.permute.xlu0 0
    %341 = vperm.xlu0 %340, %v337
    %v342 = vpop.permute.xlu0 %341
    %345 = vset.pattern.permute.xlu0 0
    %346 = vperm.xlu0 %345, %v338
    %v347 = vpop.permute.xlu0 %346
    %v351 = vunpack.c.l.b16 %v335
    %v352 = vunpack.c.l.b16 %v336
    %v353 = vpack.c.b16 %v352, %v351
    %vm354 = vcmask 588800
    %v356 = vsel %vm354, %v353, 0
    %vm358 = vcmask 1043456
    %v360 = vsel %vm358, %v334, 0
    %362 = vmatprep.subr.bf16.mxu0 0
    %363 = vmatpush1.bf16.msra.mxu0 %v330
    %364 = vmatprep.subr.bf16.mxu0 0
    %365 = vmatpush1.bf16.msra.mxu0 %v331
    %366 = vmatprep.subr.bf16.mxu0 0
    %367 = vmatpush1.bf16.msra.mxu0 %v332
    %368 = vmatprep.subr.bf16.mxu0 0
    %369 = vmatpush1.bf16.msra.mxu0 %v333
    %370 = vmatprep.subr.bf16.mxu0 0
    %371 = vmatpush1.bf16.msra.mxu0 %v360
    %372 = vmatprep.subr.bf16.mxu0 0
    %373 = vmatpush1.bf16.msra.mxu0 0
    %374 = vmatprep.subr.bf16.mxu0 0
    %375 = vmatpush1.bf16.msra.mxu0 0
    %376 = vmatprep.subr.bf16.mxu0 0
    %377 = vmatpush1.bf16.msra.mxu0 0
    %378 = vmatprep.subr.bf16.mxu0 0
    %379 = vmatpush1.bf16.msra.mxu0 0
    %380 = vmatprep.subr.bf16.mxu0 0
    %381 = vmatpush1.bf16.msra.mxu0 0
    %382 = vmatprep.subr.bf16.mxu0 0
    %383 = vmatpush1.bf16.msra.mxu0 0
    %384 = vmatprep.subr.bf16.mxu0 0
    %385 = vmatpush1.bf16.msra.mxu0 0
    %386 = vmatprep.subr.bf16.mxu0 0
    %387 = vmatpush1.bf16.msra.mxu0 0
    %388 = vmatprep.subr.bf16.mxu0 0
    %389 = vmatpush1.bf16.msra.mxu0 0
    %390 = vmatprep.subr.bf16.mxu0 0
    %391 = vmatpush1.bf16.msra.mxu0 0
    %392 = vmatprep.subr.bf16.mxu0 0
    %393 = vmatpush1.bf16.msra.mxu0 0
    %394 = vmatprep.mubr.bf16.mxu0 0
    %395 = vmatmul.mubr.bf16.gmra.mrb[0].mxu0 %v356
    %v396 = vpop.f32.mrb[0].mxu0
    %v397 = vadd.f32 %v342, %v396
    %v398 = vpop.f32.mrb[0].mxu0
    %v399 = vpop.f32.mrb[0].mxu0
    %v400 = vadd.f32 %v347, %v399
    %v401 = vpop.f32.mrb[0].mxu0
    %402 = vdwg.mxu0
    %v403 = vld [vmem:[%s6] sm:$0x1]
    %v405 = vrot.slane %v397, 1
    %406 = vrot.lane.b32.xlu0 %v405, 64
    %v407 = vpop.permute.xlu0 %406
    %v409 = vrot.slane %v397, 2
    %v411 = vrot.slane %v397, 3
    %412 = vrot.lane.b32.xlu0 %v411, 64
    %v413 = vpop.permute.xlu0 %412
    %v415 = vrot.slane %v397, 4
    %v417 = vrot.slane %v397, 5
    %418 = vrot.lane.b32.xlu0 %v417, 64
    %v419 = vpop.permute.xlu0 %418
    %v421 = vrot.slane %v397, 6
    %v423 = vrot.slane %v397, 7
    %424 = vrot.lane.b32.xlu0 %v423, 64
    %v425 = vpop.permute.xlu0 %424
    %v428 = vrot.slane %v400, 1
    %429 = vrot.lane.b32.xlu0 %v428, 64
    %v430 = vpop.permute.xlu0 %429
    %v432 = vrot.slane %v400, 2
    %v434 = vrot.slane %v400, 3
    %435 = vrot.lane.b32.xlu0 %v434, 64
    %v436 = vpop.permute.xlu0 %435
    %vm438 = vcmask 523264
    %v439 = vsel %vm438, %v397, %v407
    %v440 = vsel %vm438, %v409, %v413
    %v441 = vsel %vm438, %v415, %v419
    %v442 = vsel %vm438, %v421, %v425
    %v443 = vsel %vm438, %v400, %v430
    %v444 = vsel %vm438, %v432, %v436
    %v445 = vpack.c.bf16 %v439, %v439
    %v446 = vpack.c.bf16 %v440, %v440
    %v447 = vpack.c.bf16 %v441, %v441
    %v448 = vpack.c.bf16 %v442, %v442
    %v449 = vpack.c.bf16 %v443, %v443
    %v450 = vpack.c.bf16 %v444, %v444
    %v451 = vpack.c.bf16 %v403, %v403
    %v452 = vld [vmem:[#allocation2] sm:$0xff]
    %v453 = vld [vmem:[#allocation2 + $0x8] sm:$0xff]
    %v454 = vld [vmem:[#allocation2 + $0x10] sm:$0xff]
    %v455 = vld [vmem:[#allocation2 + $0x18] sm:$0xff]
    %v456 = vld [vmem:[#allocation2 + $0x20] sm:$0xff]
    %v457 = vld [vmem:[#allocation2 + $0x28] sm:$0xff]
    %v458 = vld [vmem:[#allocation2 + $0x30] sm:$0xff]
    %v459 = vld [vmem:[#allocation2 + $0x38] sm:$0xff]
    %v460 = vld [vmem:[#allocation2 + $0x40] sm:$0xff]
    %v461 = vld [vmem:[#allocation2 + $0x48] sm:$0xff]
    %v462 = vld [vmem:[#allocation2 + $0x50] sm:$0xff]
    %v463 = vld [vmem:[#allocation2 + $0x58] sm:$0xff]
    %v464 = vld [vmem:[#allocation2 + $0x60] sm:$0xff]
    %v465 = vld [vmem:[#allocation2 + $0x68] sm:$0xff]
    %v466 = vld [vmem:[#allocation2 + $0x70] sm:$0xff]
    %v467 = vld [vmem:[#allocation2 + $0x78] sm:$0xff]
    %v468 = vld [vmem:[#allocation2 + $0x80] sm:$0xff]
    %v469 = vld [vmem:[#allocation2 + $0x88] sm:$0xff]
    %v470 = vld [vmem:[#allocation2 + $0x90] sm:$0xff]
    %v471 = vld [vmem:[#allocation2 + $0x98] sm:$0xff]
    %v472 = vld [vmem:[#allocation2 + $0xa0] sm:$0xff]
    %v473 = vld [vmem:[#allocation2 + $0xa8] sm:$0xff]
    %v474 = vld [vmem:[#allocation2 + $0xb0] sm:$0xff]
    %v475 = vld [vmem:[#allocation2 + $0xb8] sm:$0xff]
    %v476 = vld [vmem:[#allocation2 + $0xc0] sm:$0xff]
    %v477 = vld [vmem:[#allocation2 + $0xc8] sm:$0xff]
    %v478 = vld [vmem:[#allocation2 + $0xd0] sm:$0xff]
    %v479 = vld [vmem:[#allocation2 + $0xd8] sm:$0xff]
    %v480 = vld [vmem:[#allocation2 + $0xe0] sm:$0xff]
    %v481 = vld [vmem:[#allocation2 + $0xe8] sm:$0xff]
    %v482 = vld [vmem:[#allocation2 + $0xf0] sm:$0xff]
    %v483 = vld [vmem:[#allocation2 + $0xf8] sm:$0xff]
    %v484 = vld [vmem:[#allocation2 + $0x100] sm:$0xff]
    %v485 = vld [vmem:[#allocation2 + $0x108] sm:$0xff]
    %v486 = vld [vmem:[#allocation2 + $0x110] sm:$0xff]
    %v487 = vld [vmem:[#allocation2 + $0x118] sm:$0xff]
    %v488 = vld [vmem:[#allocation2 + $0x120] sm:$0xff]
    %v489 = vld [vmem:[#allocation2 + $0x128] sm:$0xff]
    %v490 = vld [vmem:[#allocation2 + $0x130] sm:$0xff]
    %v491 = vld [vmem:[#allocation2 + $0x138] sm:$0xff]
    %v492 = vld [vmem:[#allocation2 + $0x140] sm:$0xff]
    %v493 = vld [vmem:[#allocation2 + $0x148] sm:$0xff]
    %v494 = vld [vmem:[#allocation2 + $0x150] sm:$0xff]
    %v495 = vld [vmem:[#allocation2 + $0x158] sm:$0xff]
    %v496 = vld [vmem:[#allocation2 + $0x160] sm:$0xff]
    %v497 = vld [vmem:[#allocation2 + $0x168] sm:$0xff]
    %v498 = vld [vmem:[#allocation2 + $0x170] sm:$0xff]
    %v499 = vld [vmem:[#allocation2 + $0x178] sm:$0xff]
    %v500 = vld [vmem:[#allocation2 + $0x180] sm:$0xff]
    %v501 = vld [vmem:[#allocation2 + $0x188] sm:$0xff]
    %v502 = vld [vmem:[#allocation2 + $0x190] sm:$0xff]
    %v503 = vld [vmem:[#allocation2 + $0x198] sm:$0xff]
    %v504 = vld [vmem:[#allocation2 + $0x1a0] sm:$0xff]
    %v505 = vld [vmem:[#allocation2 + $0x1a8] sm:$0xff]
    %v506 = vld [vmem:[#allocation2 + $0x1b0] sm:$0xff]
    %v507 = vld [vmem:[#allocation2 + $0x1b8] sm:$0xff]
    %v508 = vld [vmem:[#allocation2 + $0x1c0] sm:$0xff]
    %v509 = vld [vmem:[#allocation2 + $0x1c8] sm:$0xff]
    %v510 = vld [vmem:[#allocation2 + $0x1d0] sm:$0xff]
    %v511 = vld [vmem:[#allocation2 + $0x1d8] sm:$0xff]
    %v512 = vld [vmem:[#allocation2 + $0x1e0] sm:$0xff]
    %v513 = vld [vmem:[#allocation2 + $0x1e8] sm:$0xff]
    %v514 = vld [vmem:[#allocation2 + $0x1f0] sm:$0xff]
    %v515 = vld [vmem:[#allocation2 + $0x1f8] sm:$0xff]
    %v516 = vld [vmem:[#allocation2 + $0x200] sm:$0xff]
    %v517 = vld [vmem:[#allocation2 + $0x208] sm:$0xff]
    %v518 = vld [vmem:[#allocation2 + $0x210] sm:$0xff]
    %v519 = vld [vmem:[#allocation2 + $0x218] sm:$0xff]
    %v520 = vld [vmem:[#allocation2 + $0x220] sm:$0xff]
    %v521 = vld [vmem:[#allocation2 + $0x228] sm:$0xff]
    %v522 = vld [vmem:[#allocation2 + $0x230] sm:$0xff]
    %v523 = vld [vmem:[#allocation2 + $0x238] sm:$0xff]
    %v524 = vld [vmem:[#allocation2 + $0x240] sm:$0xff]
    %v525 = vld [vmem:[#allocation2 + $0x248] sm:$0xff]
    %v526 = vld [vmem:[#allocation2 + $0x250] sm:$0xff]
    %v527 = vld [vmem:[#allocation2 + $0x258] sm:$0xff]
    %v528 = vld [vmem:[#allocation2 + $0x260] sm:$0xff]
    %v529 = vld [vmem:[#allocation2 + $0x268] sm:$0xff]
    %v530 = vld [vmem:[#allocation2 + $0x270] sm:$0xff]
    %v531 = vld [vmem:[#allocation2 + $0x278] sm:$0xff]
    %v532 = vld [vmem:[#allocation2 + $0x280] sm:$0xff]
    %v533 = vld [vmem:[#allocation2 + $0x288] sm:$0xff]
    %v534 = vld [vmem:[#allocation2 + $0x290] sm:$0xff]
    %v535 = vld [vmem:[#allocation2 + $0x298] sm:$0xff]
    %v536 = vld [vmem:[#allocation2 + $0x2a0] sm:$0xff]
    %v537 = vld [vmem:[#allocation2 + $0x2a8] sm:$0xff]
    %v538 = vld [vmem:[#allocation2 + $0x2b0] sm:$0xff]
    %v539 = vld [vmem:[#allocation2 + $0x2b8] sm:$0xff]
    %v540 = vld [vmem:[#allocation2 + $0x2c0] sm:$0xff]
    %v541 = vld [vmem:[#allocation2 + $0x2c8] sm:$0xff]
    %v542 = vld [vmem:[#allocation2 + $0x2d0] sm:$0xff]
    %v543 = vld [vmem:[#allocation2 + $0x2d8] sm:$0xff]
    %v544 = vld [vmem:[#allocation2 + $0x2e0] sm:$0xff]
    %v545 = vld [vmem:[#allocation2 + $0x2e8] sm:$0xff]
    %v546 = vld [vmem:[#allocation2 + $0x2f0] sm:$0xff]
    %v547 = vld [vmem:[#allocation2 + $0x2f8] sm:$0xff]
    %v548 = vld [vmem:[#allocation2 + $0x300] sm:$0xff]
    %v549 = vld [vmem:[#allocation2 + $0x308] sm:$0xff]
    %v550 = vld [vmem:[#allocation2 + $0x310] sm:$0xff]
    %v551 = vld [vmem:[#allocation2 + $0x318] sm:$0xff]
    %v552 = vld [vmem:[#allocation2 + $0x320] sm:$0xff]
    %v553 = vld [vmem:[#allocation2 + $0x328] sm:$0xff]
    %v554 = vld [vmem:[#allocation2 + $0x330] sm:$0xff]
    %v555 = vld [vmem:[#allocation2 + $0x338] sm:$0xff]
    %v556 = vld [vmem:[#allocation2 + $0x340] sm:$0xff]
    %v557 = vld [vmem:[#allocation2 + $0x348] sm:$0xff]
    %v558 = vld [vmem:[#allocation2 + $0x350] sm:$0xff]
    %v559 = vld [vmem:[#allocation2 + $0x358] sm:$0xff]
    %v560 = vld [vmem:[#allocation2 + $0x360] sm:$0xff]
    %v561 = vld [vmem:[#allocation2 + $0x368] sm:$0xff]
    %v562 = vld [vmem:[#allocation2 + $0x370] sm:$0xff]
    %v563 = vld [vmem:[#allocation2 + $0x378] sm:$0xff]
    %v564 = vld [vmem:[#allocation2 + $0x380] sm:$0xff]
    %v565 = vld [vmem:[#allocation2 + $0x388] sm:$0xff]
    %v566 = vld [vmem:[#allocation2 + $0x390] sm:$0xff]
    %v567 = vld [vmem:[#allocation2 + $0x398] sm:$0xff]
    %v568 = vld [vmem:[#allocation2 + $0x3a0] sm:$0xff]
    %v569 = vld [vmem:[#allocation2 + $0x3a8] sm:$0xff]
    %v570 = vld [vmem:[#allocation2 + $0x3b0] sm:$0xff]
    %v571 = vld [vmem:[#allocation2 + $0x3b8] sm:$0xff]
    %v572 = vld [vmem:[#allocation2 + $0x3c0] sm:$0xff]
    %v573 = vld [vmem:[#allocation2 + $0x3c8] sm:$0xff]
    %v574 = vld [vmem:[#allocation2 + $0x3d0] sm:$0xff]
    %v575 = vld [vmem:[#allocation2 + $0x3d8] sm:$0xff]
    %v576 = vld [vmem:[#allocation2 + $0x3e0] sm:$0xff]
    %v577 = vld [vmem:[#allocation2 + $0x3e8] sm:$0xff]
    %v578 = vld [vmem:[#allocation2 + $0x3f0] sm:$0xff]
    %v579 = vld [vmem:[#allocation2 + $0x3f8] sm:$0xff]
    %v580 = vld [vmem:[#allocation2 + $0x400] sm:$0xff]
    %v581 = vld [vmem:[#allocation2 + $0x408] sm:$0xff]
    %v582 = vld [vmem:[#allocation2 + $0x410] sm:$0xff]
    %v583 = vld [vmem:[#allocation2 + $0x418] sm:$0xff]
    %v584 = vld [vmem:[#allocation2 + $0x420] sm:$0xff]
    %v585 = vld [vmem:[#allocation2 + $0x428] sm:$0xff]
    %v586 = vld [vmem:[#allocation2 + $0x430] sm:$0xff]
    %v587 = vld [vmem:[#allocation2 + $0x438] sm:$0xff]
    %v588 = vld [vmem:[#allocation2 + $0x440] sm:$0xff]
    %v589 = vld [vmem:[#allocation2 + $0x448] sm:$0xff]
    %v590 = vld [vmem:[#allocation2 + $0x450] sm:$0xff]
    %v591 = vld [vmem:[#allocation2 + $0x458] sm:$0xff]
    %v592 = vld [vmem:[#allocation2 + $0x460] sm:$0xff]
    %v593 = vld [vmem:[#allocation2 + $0x468] sm:$0xff]
    %v594 = vld [vmem:[#allocation2 + $0x470] sm:$0xff]
    %v595 = vld [vmem:[#allocation2 + $0x478] sm:$0xff]
    %v596 = vld [vmem:[#allocation2 + $0x480] sm:$0xff]
    %v597 = vld [vmem:[#allocation2 + $0x488] sm:$0xff]
    %v598 = vld [vmem:[#allocation2 + $0x490] sm:$0xff]
    %v599 = vld [vmem:[#allocation2 + $0x498] sm:$0xff]
    %v600 = vld [vmem:[#allocation2 + $0x4a0] sm:$0xff]
    %v601 = vld [vmem:[#allocation2 + $0x4a8] sm:$0xff]
    %v602 = vld [vmem:[#allocation2 + $0x4b0] sm:$0xff]
    %v603 = vld [vmem:[#allocation2 + $0x4b8] sm:$0xff]
    %v604 = vld [vmem:[#allocation2 + $0x4c0] sm:$0xff]
    %v605 = vld [vmem:[#allocation2 + $0x4c8] sm:$0xff]
    %v606 = vld [vmem:[#allocation2 + $0x4d0] sm:$0xff]
    %v607 = vld [vmem:[#allocation2 + $0x4d8] sm:$0xff]
    %v608 = vld [vmem:[#allocation2 + $0x4e0] sm:$0xff]
    %v609 = vld [vmem:[#allocation2 + $0x4e8] sm:$0xff]
    %v610 = vld [vmem:[#allocation2 + $0x4f0] sm:$0xff]
    %v611 = vld [vmem:[#allocation2 + $0x4f8] sm:$0xff]
    %v612 = vld [vmem:[#allocation2 + $0x500] sm:$0xff]
    %v613 = vld [vmem:[#allocation2 + $0x508] sm:$0xff]
    %v614 = vld [vmem:[#allocation2 + $0x510] sm:$0xff]
    %v615 = vld [vmem:[#allocation2 + $0x518] sm:$0xff]
    %v616 = vld [vmem:[#allocation2 + $0x520] sm:$0xff]
    %v617 = vld [vmem:[#allocation2 + $0x528] sm:$0xff]
    %v618 = vld [vmem:[#allocation2 + $0x530] sm:$0xff]
    %v619 = vld [vmem:[#allocation2 + $0x538] sm:$0xff]
    %v620 = vld [vmem:[#allocation2 + $0x540] sm:$0xff]
    %v621 = vld [vmem:[#allocation2 + $0x548] sm:$0xff]
    %v622 = vld [vmem:[#allocation2 + $0x550] sm:$0xff]
    %v623 = vld [vmem:[#allocation2 + $0x558] sm:$0xff]
    %v624 = vld [vmem:[#allocation2 + $0x560] sm:$0xff]
    %v625 = vld [vmem:[#allocation2 + $0x568] sm:$0xff]
    %v626 = vld [vmem:[#allocation2 + $0x570] sm:$0xff]
    %v627 = vld [vmem:[#allocation2 + $0x578] sm:$0xff]
    %v628 = vld [vmem:[#allocation2 + $0x580] sm:$0xff]
    %v629 = vld [vmem:[#allocation2 + $0x588] sm:$0xff]
    %v630 = vld [vmem:[#allocation2 + $0x590] sm:$0xff]
    %v631 = vld [vmem:[#allocation2 + $0x598] sm:$0xff]
    %v632 = vld [vmem:[#allocation2 + $0x5a0] sm:$0xff]
    %v633 = vld [vmem:[#allocation2 + $0x5a8] sm:$0xff]
    %v634 = vld [vmem:[#allocation2 + $0x5b0] sm:$0xff]
    %v635 = vld [vmem:[#allocation2 + $0x5b8] sm:$0xff]
    %v636 = vld [vmem:[#allocation2 + $0x5c0] sm:$0xff]
    %v637 = vld [vmem:[#allocation2 + $0x5c8] sm:$0xff]
    %v638 = vld [vmem:[#allocation2 + $0x5d0] sm:$0xff]
    %v639 = vld [vmem:[#allocation2 + $0x5d8] sm:$0xff]
    %v640 = vld [vmem:[#allocation2 + $0x5e0] sm:$0xff]
    %v641 = vld [vmem:[#allocation2 + $0x5e8] sm:$0xff]
    %v642 = vld [vmem:[#allocation2 + $0x5f0] sm:$0xff]
    %v643 = vld [vmem:[#allocation2 + $0x5f8] sm:$0xff]
    %v644 = vld [vmem:[#allocation2 + $0x600] sm:$0xff]
    %v645 = vld [vmem:[#allocation2 + $0x608] sm:$0xff]
    %v646 = vld [vmem:[#allocation2 + $0x610] sm:$0xff]
    %v647 = vld [vmem:[#allocation2 + $0x618] sm:$0xff]
    %v648 = vld [vmem:[#allocation2 + $0x620] sm:$0xff]
    %v649 = vld [vmem:[#allocation2 + $0x628] sm:$0xff]
    %v650 = vld [vmem:[#allocation2 + $0x630] sm:$0xff]
    %v651 = vld [vmem:[#allocation2 + $0x638] sm:$0xff]
    %v652 = vld [vmem:[#allocation2 + $0x640] sm:$0xff]
    %v653 = vld [vmem:[#allocation2 + $0x648] sm:$0xff]
    %v654 = vld [vmem:[#allocation2 + $0x650] sm:$0xff]
    %v655 = vld [vmem:[#allocation2 + $0x658] sm:$0xff]
    %v656 = vld [vmem:[#allocation2 + $0x660] sm:$0xff]
    %v657 = vld [vmem:[#allocation2 + $0x668] sm:$0xff]
    %v658 = vld [vmem:[#allocation2 + $0x670] sm:$0xff]
    %v659 = vld [vmem:[#allocation2 + $0x678] sm:$0xff]
    %v660 = vld [vmem:[#allocation2 + $0x680] sm:$0xff]
    %v661 = vld [vmem:[#allocation2 + $0x688] sm:$0xff]
    %v662 = vld [vmem:[#allocation2 + $0x690] sm:$0xff]
    %v663 = vld [vmem:[#allocation2 + $0x698] sm:$0xff]
    %v664 = vld [vmem:[#allocation2 + $0x6a0] sm:$0xff]
    %v665 = vld [vmem:[#allocation2 + $0x6a8] sm:$0xff]
    %v666 = vld [vmem:[#allocation2 + $0x6b0] sm:$0xff]
    %v667 = vld [vmem:[#allocation2 + $0x6b8] sm:$0xff]
    %v668 = vld [vmem:[#allocation2 + $0x6c0] sm:$0xff]
    %v669 = vld [vmem:[#allocation2 + $0x6c8] sm:$0xff]
    %v670 = vld [vmem:[#allocation2 + $0x6d0] sm:$0xff]
    %v671 = vld [vmem:[#allocation2 + $0x6d8] sm:$0xff]
    %v672 = vld [vmem:[#allocation2 + $0x6e0] sm:$0xff]
    %v673 = vld [vmem:[#allocation2 + $0x6e8] sm:$0xff]
    %v674 = vld [vmem:[#allocation2 + $0x6f0] sm:$0xff]
    %v675 = vld [vmem:[#allocation2 + $0x6f8] sm:$0xff]
    %v676 = vld [vmem:[%s9] sm:$0xf]
    %v901 = vunpack.c.l.b16 %v452
    %v902 = vunpack.c.h.b16 %v452
    %v903 = vunpack.c.l.b16 %v453
    %v904 = vunpack.c.h.b16 %v453
    %v905 = vunpack.c.l.b16 %v454
    %v906 = vunpack.c.h.b16 %v454
    %v907 = vunpack.c.l.b16 %v455
    %v908 = vunpack.c.h.b16 %v455
    %v909 = vunpack.c.l.b16 %v456
    %v910 = vunpack.c.h.b16 %v456
    %v911 = vunpack.c.l.b16 %v457
    %v912 = vunpack.c.h.b16 %v457
    %v913 = vunpack.c.l.b16 %v458
    %v914 = vunpack.c.h.b16 %v458
    %v915 = vunpack.c.l.b16 %v459
    %v916 = vunpack.c.h.b16 %v459
    %v917 = vunpack.c.l.b16 %v460
    %v918 = vunpack.c.h.b16 %v460
    %v919 = vunpack.c.l.b16 %v461
    %v920 = vunpack.c.h.b16 %v461
    %v921 = vunpack.c.l.b16 %v462
    %v922 = vunpack.c.h.b16 %v462
    %v923 = vunpack.c.l.b16 %v463
    %v924 = vunpack.c.h.b16 %v463
    %v925 = vunpack.c.l.b16 %v464
    %v926 = vunpack.c.h.b16 %v464
    %v927 = vunpack.c.l.b16 %v465
    %v928 = vunpack.c.h.b16 %v465
    %v929 = vunpack.c.l.b16 %v466
    %v930 = vunpack.c.h.b16 %v466
    %v931 = vunpack.c.l.b16 %v467
    %v932 = vunpack.c.h.b16 %v467
    %v933 = vunpack.c.l.b16 %v468
    %v934 = vunpack.c.h.b16 %v468
    %v935 = vunpack.c.l.b16 %v469
    %v936 = vunpack.c.h.b16 %v469
    %v937 = vunpack.c.l.b16 %v470
    %v938 = vunpack.c.h.b16 %v470
    %v939 = vunpack.c.l.b16 %v471
    %v940 = vunpack.c.h.b16 %v471
    %v941 = vunpack.c.l.b16 %v472
    %v942 = vunpack.c.h.b16 %v472
    %v943 = vunpack.c.l.b16 %v473
    %v944 = vunpack.c.h.b16 %v473
    %v945 = vunpack.c.l.b16 %v474
    %v946 = vunpack.c.h.b16 %v474
    %v947 = vunpack.c.l.b16 %v475
    %v948 = vunpack.c.h.b16 %v475
    %v949 = vunpack.c.l.b16 %v476
    %v950 = vunpack.c.h.b16 %v476
    %v951 = vunpack.c.l.b16 %v477
    %v952 = vunpack.c.h.b16 %v477
    %v953 = vunpack.c.l.b16 %v478
    %v954 = vunpack.c.h.b16 %v478
    %v955 = vunpack.c.l.b16 %v479
    %v956 = vunpack.c.h.b16 %v479
    %v957 = vunpack.c.l.b16 %v480
    %v958 = vunpack.c.h.b16 %v480
    %v959 = vunpack.c.l.b16 %v481
    %v960 = vunpack.c.h.b16 %v481
    %v961 = vunpack.c.l.b16 %v482
    %v962 = vunpack.c.h.b16 %v482
    %v963 = vunpack.c.l.b16 %v483
    %v964 = vunpack.c.h.b16 %v483
    %v965 = vunpack.c.l.b16 %v484
    %v966 = vunpack.c.h.b16 %v484
    %v967 = vunpack.c.l.b16 %v485
    %v968 = vunpack.c.h.b16 %v485
    %v969 = vunpack.c.l.b16 %v486
    %v970 = vunpack.c.h.b16 %v486
    %v971 = vunpack.c.l.b16 %v487
    %v972 = vunpack.c.h.b16 %v487
    %v973 = vunpack.c.l.b16 %v488
    %v974 = vunpack.c.h.b16 %v488
    %v975 = vunpack.c.l.b16 %v489
    %v976 = vunpack.c.h.b16 %v489
    %v977 = vunpack.c.l.b16 %v490
    %v978 = vunpack.c.h.b16 %v490
    %v979 = vunpack.c.l.b16 %v491
    %v980 = vunpack.c.h.b16 %v491
    %v981 = vunpack.c.l.b16 %v492
    %v982 = vunpack.c.h.b16 %v492
    %v983 = vunpack.c.l.b16 %v493
    %v984 = vunpack.c.h.b16 %v493
    %v985 = vunpack.c.l.b16 %v494
    %v986 = vunpack.c.h.b16 %v494
    %v987 = vunpack.c.l.b16 %v495
    %v988 = vunpack.c.h.b16 %v495
    %v989 = vunpack.c.l.b16 %v496
    %v990 = vunpack.c.h.b16 %v496
    %v991 = vunpack.c.l.b16 %v497
    %v992 = vunpack.c.h.b16 %v497
    %v993 = vunpack.c.l.b16 %v498
    %v994 = vunpack.c.h.b16 %v498
    %v995 = vunpack.c.l.b16 %v499
    %v996 = vunpack.c.h.b16 %v499
    %v997 = vunpack.c.l.b16 %v500
    %v998 = vunpack.c.h.b16 %v500
    %v999 = vunpack.c.l.b16 %v501
    %v1000 = vunpack.c.h.b16 %v501
    %v1001 = vunpack.c.l.b16 %v502
    %v1002 = vunpack.c.h.b16 %v502
    %v1003 = vunpack.c.l.b16 %v503
    %v1004 = vunpack.c.h.b16 %v503
    %v1005 = vunpack.c.l.b16 %v504
    %v1006 = vunpack.c.h.b16 %v504
    %v1007 = vunpack.c.l.b16 %v505
    %v1008 = vunpack.c.h.b16 %v505
    %v1009 = vunpack.c.l.b16 %v506
    %v1010 = vunpack.c.h.b16 %v506
    %v1011 = vunpack.c.l.b16 %v507
    %v1012 = vunpack.c.h.b16 %v507
    %v1013 = vunpack.c.l.b16 %v508
    %v1014 = vunpack.c.h.b16 %v508
    %v1015 = vunpack.c.l.b16 %v509
    %v1016 = vunpack.c.h.b16 %v509
    %v1017 = vunpack.c.l.b16 %v510
    %v1018 = vunpack.c.h.b16 %v510
    %v1019 = vunpack.c.l.b16 %v511
    %v1020 = vunpack.c.h.b16 %v511
    %v1021 = vunpack.c.l.b16 %v512
    %v1022 = vunpack.c.h.b16 %v512
    %v1023 = vunpack.c.l.b16 %v513
    %v1024 = vunpack.c.h.b16 %v513
    %v1025 = vunpack.c.l.b16 %v514
    %v1026 = vunpack.c.h.b16 %v514
    %v1027 = vunpack.c.l.b16 %v515
    %v1028 = vunpack.c.h.b16 %v515
    %v1029 = vunpack.c.l.b16 %v516
    %v1030 = vunpack.c.h.b16 %v516
    %v1031 = vunpack.c.l.b16 %v517
    %v1032 = vunpack.c.h.b16 %v517
    %v1033 = vunpack.c.l.b16 %v518
    %v1034 = vunpack.c.h.b16 %v518
    %v1035 = vunpack.c.l.b16 %v519
    %v1036 = vunpack.c.h.b16 %v519
    %v1037 = vunpack.c.l.b16 %v520
    %v1038 = vunpack.c.h.b16 %v520
    %v1039 = vunpack.c.l.b16 %v521
    %v1040 = vunpack.c.h.b16 %v521
    %v1041 = vunpack.c.l.b16 %v522
    %v1042 = vunpack.c.h.b16 %v522
    %v1043 = vunpack.c.l.b16 %v523
    %v1044 = vunpack.c.h.b16 %v523
    %v1045 = vunpack.c.l.b16 %v524
    %v1046 = vunpack.c.h.b16 %v524
    %v1047 = vunpack.c.l.b16 %v525
    %v1048 = vunpack.c.h.b16 %v525
    %v1049 = vunpack.c.l.b16 %v526
    %v1050 = vunpack.c.h.b16 %v526
    %v1051 = vunpack.c.l.b16 %v527
    %v1052 = vunpack.c.h.b16 %v527
    %v1053 = vunpack.c.l.b16 %v528
    %v1054 = vunpack.c.h.b16 %v528
    %v1055 = vunpack.c.l.b16 %v529
    %v1056 = vunpack.c.h.b16 %v529
    %v1057 = vunpack.c.l.b16 %v530
    %v1058 = vunpack.c.h.b16 %v530
    %v1059 = vunpack.c.l.b16 %v531
    %v1060 = vunpack.c.h.b16 %v531
    %v1061 = vunpack.c.l.b16 %v532
    %v1062 = vunpack.c.h.b16 %v532
    %v1063 = vunpack.c.l.b16 %v533
    %v1064 = vunpack.c.h.b16 %v533
    %v1065 = vunpack.c.l.b16 %v534
    %v1066 = vunpack.c.h.b16 %v534
    %v1067 = vunpack.c.l.b16 %v535
    %v1068 = vunpack.c.h.b16 %v535
    %v1069 = vunpack.c.l.b16 %v536
    %v1070 = vunpack.c.h.b16 %v536
    %v1071 = vunpack.c.l.b16 %v537
    %v1072 = vunpack.c.h.b16 %v537
    %v1073 = vunpack.c.l.b16 %v538
    %v1074 = vunpack.c.h.b16 %v538
    %v1075 = vunpack.c.l.b16 %v539
    %v1076 = vunpack.c.h.b16 %v539
    %v1077 = vunpack.c.l.b16 %v540
    %v1078 = vunpack.c.h.b16 %v540
    %v1079 = vunpack.c.l.b16 %v541
    %v1080 = vunpack.c.h.b16 %v541
    %v1081 = vunpack.c.l.b16 %v542
    %v1082 = vunpack.c.h.b16 %v542
    %v1083 = vunpack.c.l.b16 %v543
    %v1084 = vunpack.c.h.b16 %v543
    %v1085 = vunpack.c.l.b16 %v544
    %v1086 = vunpack.c.h.b16 %v544
    %v1087 = vunpack.c.l.b16 %v545
    %v1088 = vunpack.c.h.b16 %v545
    %v1089 = vunpack.c.l.b16 %v546
    %v1090 = vunpack.c.h.b16 %v546
    %v1091 = vunpack.c.l.b16 %v547
    %v1092 = vunpack.c.h.b16 %v547
    %v1093 = vunpack.c.l.b16 %v548
    %v1094 = vunpack.c.h.b16 %v548
    %v1095 = vunpack.c.l.b16 %v549
    %v1096 = vunpack.c.h.b16 %v549
    %v1097 = vunpack.c.l.b16 %v550
    %v1098 = vunpack.c.h.b16 %v550
    %v1099 = vunpack.c.l.b16 %v551
    %v1100 = vunpack.c.h.b16 %v551
    %v1101 = vunpack.c.l.b16 %v552
    %v1102 = vunpack.c.h.b16 %v552
    %v1103 = vunpack.c.l.b16 %v553
    %v1104 = vunpack.c.h.b16 %v553
    %v1105 = vunpack.c.l.b16 %v554
    %v1106 = vunpack.c.h.b16 %v554
    %v1107 = vunpack.c.l.b16 %v555
    %v1108 = vunpack.c.h.b16 %v555
    %v1109 = vunpack.c.l.b16 %v556
    %v1110 = vunpack.c.h.b16 %v556
    %v1111 = vunpack.c.l.b16 %v557
    %v1112 = vunpack.c.h.b16 %v557
    %v1113 = vunpack.c.l.b16 %v558
    %v1114 = vunpack.c.h.b16 %v558
    %v1115 = vunpack.c.l.b16 %v559
    %v1116 = vunpack.c.h.b16 %v559
    %v1117 = vunpack.c.l.b16 %v560
    %v1118 = vunpack.c.h.b16 %v560
    %v1119 = vunpack.c.l.b16 %v561
    %v1120 = vunpack.c.h.b16 %v561
    %v1121 = vunpack.c.l.b16 %v562
    %v1122 = vunpack.c.h.b16 %v562
    %v1123 = vunpack.c.l.b16 %v563
    %v1124 = vunpack.c.h.b16 %v563
    %v1125 = vunpack.c.l.b16 %v564
    %v1126 = vunpack.c.h.b16 %v564
    %v1127 = vunpack.c.l.b16 %v565
    %v1128 = vunpack.c.h.b16 %v565
    %v1129 = vunpack.c.l.b16 %v566
    %v1130 = vunpack.c.h.b16 %v566
    %v1131 = vunpack.c.l.b16 %v567
    %v1132 = vunpack.c.h.b16 %v567
    %v1133 = vunpack.c.l.b16 %v568
    %v1134 = vunpack.c.h.b16 %v568
    %v1135 = vunpack.c.l.b16 %v569
    %v1136 = vunpack.c.h.b16 %v569
    %v1137 = vunpack.c.l.b16 %v570
    %v1138 = vunpack.c.h.b16 %v570
    %v1139 = vunpack.c.l.b16 %v571
    %v1140 = vunpack.c.h.b16 %v571
    %v1141 = vunpack.c.l.b16 %v572
    %v1142 = vunpack.c.h.b16 %v572
    %v1143 = vunpack.c.l.b16 %v573
    %v1144 = vunpack.c.h.b16 %v573
    %v1145 = vunpack.c.l.b16 %v574
    %v1146 = vunpack.c.h.b16 %v574
    %v1147 = vunpack.c.l.b16 %v575
    %v1148 = vunpack.c.h.b16 %v575
    %v1149 = vunpack.c.l.b16 %v576
    %v1150 = vunpack.c.h.b16 %v576
    %v1151 = vunpack.c.l.b16 %v577
    %v1152 = vunpack.c.h.b16 %v577
    %v1153 = vunpack.c.l.b16 %v578
    %v1154 = vunpack.c.h.b16 %v578
    %v1155 = vunpack.c.l.b16 %v579
    %v1156 = vunpack.c.h.b16 %v579
    %v1157 = vunpack.c.l.b16 %v580
    %v1158 = vunpack.c.h.b16 %v580
    %v1159 = vunpack.c.l.b16 %v581
    %v1160 = vunpack.c.h.b16 %v581
    %v1161 = vunpack.c.l.b16 %v582
    %v1162 = vunpack.c.h.b16 %v582
    %v1163 = vunpack.c.l.b16 %v583
    %v1164 = vunpack.c.h.b16 %v583
    %v1165 = vunpack.c.l.b16 %v584
    %v1166 = vunpack.c.h.b16 %v584
    %v1167 = vunpack.c.l.b16 %v585
    %v1168 = vunpack.c.h.b16 %v585
    %v1169 = vunpack.c.l.b16 %v586
    %v1170 = vunpack.c.h.b16 %v586
    %v1171 = vunpack.c.l.b16 %v587
    %v1172 = vunpack.c.h.b16 %v587
    %v1173 = vunpack.c.l.b16 %v588
    %v1174 = vunpack.c.h.b16 %v588
    %v1175 = vunpack.c.l.b16 %v589
    %v1176 = vunpack.c.h.b16 %v589
    %v1177 = vunpack.c.l.b16 %v590
    %v1178 = vunpack.c.h.b16 %v590
    %v1179 = vunpack.c.l.b16 %v591
    %v1180 = vunpack.c.h.b16 %v591
    %v1181 = vunpack.c.l.b16 %v592
    %v1182 = vunpack.c.h.b16 %v592
    %v1183 = vunpack.c.l.b16 %v593
    %v1184 = vunpack.c.h.b16 %v593
    %v1185 = vunpack.c.l.b16 %v594
    %v1186 = vunpack.c.h.b16 %v594
    %v1187 = vunpack.c.l.b16 %v595
    %v1188 = vunpack.c.h.b16 %v595
    %v1189 = vunpack.c.l.b16 %v596
    %v1190 = vunpack.c.h.b16 %v596
    %v1191 = vunpack.c.l.b16 %v597
    %v1192 = vunpack.c.h.b16 %v597
    %v1193 = vunpack.c.l.b16 %v598
    %v1194 = vunpack.c.h.b16 %v598
    %v1195 = vunpack.c.l.b16 %v599
    %v1196 = vunpack.c.h.b16 %v599
    %v1197 = vunpack.c.l.b16 %v600
    %v1198 = vunpack.c.h.b16 %v600
    %v1199 = vunpack.c.l.b16 %v601
    %v1200 = vunpack.c.h.b16 %v601
    %v1201 = vunpack.c.l.b16 %v602
    %v1202 = vunpack.c.h.b16 %v602
    %v1203 = vunpack.c.l.b16 %v603
    %v1204 = vunpack.c.h.b16 %v603
    %v1205 = vunpack.c.l.b16 %v604
    %v1206 = vunpack.c.h.b16 %v604
    %v1207 = vunpack.c.l.b16 %v605
    %v1208 = vunpack.c.h.b16 %v605
    %v1209 = vunpack.c.l.b16 %v606
    %v1210 = vunpack.c.h.b16 %v606
    %v1211 = vunpack.c.l.b16 %v607
    %v1212 = vunpack.c.h.b16 %v607
    %v1213 = vunpack.c.l.b16 %v608
    %v1214 = vunpack.c.h.b16 %v608
    %v1215 = vunpack.c.l.b16 %v609
    %v1216 = vunpack.c.h.b16 %v609
    %v1217 = vunpack.c.l.b16 %v610
    %v1218 = vunpack.c.h.b16 %v610
    %v1219 = vunpack.c.l.b16 %v611
    %v1220 = vunpack.c.h.b16 %v611
    %v1221 = vunpack.c.l.b16 %v612
    %v1222 = vunpack.c.h.b16 %v612
    %v1223 = vunpack.c.l.b16 %v613
    %v1224 = vunpack.c.h.b16 %v613
    %v1225 = vunpack.c.l.b16 %v614
    %v1226 = vunpack.c.h.b16 %v614
    %v1227 = vunpack.c.l.b16 %v615
    %v1228 = vunpack.c.h.b16 %v615
    %v1229 = vunpack.c.l.b16 %v616
    %v1230 = vunpack.c.h.b16 %v616
    %v1231 = vunpack.c.l.b16 %v617
    %v1232 = vunpack.c.h.b16 %v617
    %v1233 = vunpack.c.l.b16 %v618
    %v1234 = vunpack.c.h.b16 %v618
    %v1235 = vunpack.c.l.b16 %v619
    %v1236 = vunpack.c.h.b16 %v619
    %v1237 = vunpack.c.l.b16 %v620
    %v1238 = vunpack.c.h.b16 %v620
    %v1239 = vunpack.c.l.b16 %v621
    %v1240 = vunpack.c.h.b16 %v621
    %v1241 = vunpack.c.l.b16 %v622
    %v1242 = vunpack.c.h.b16 %v622
    %v1243 = vunpack.c.l.b16 %v623
    %v1244 = vunpack.c.h.b16 %v623
    %v1245 = vunpack.c.l.b16 %v624
    %v1246 = vunpack.c.h.b16 %v624
    %v1247 = vunpack.c.l.b16 %v625
    %v1248 = vunpack.c.h.b16 %v625
    %v1249 = vunpack.c.l.b16 %v626
    %v1250 = vunpack.c.h.b16 %v626
    %v1251 = vunpack.c.l.b16 %v627
    %v1252 = vunpack.c.h.b16 %v627
    %v1253 = vunpack.c.l.b16 %v628
    %v1254 = vunpack.c.h.b16 %v628
    %v1255 = vunpack.c.l.b16 %v629
    %v1256 = vunpack.c.h.b16 %v629
    %v1257 = vunpack.c.l.b16 %v630
    %v1258 = vunpack.c.h.b16 %v630
    %v1259 = vunpack.c.l.b16 %v631
    %v1260 = vunpack.c.h.b16 %v631
    %v1261 = vunpack.c.l.b16 %v632
    %v1262 = vunpack.c.h.b16 %v632
    %v1263 = vunpack.c.l.b16 %v633
    %v1264 = vunpack.c.h.b16 %v633
    %v1265 = vunpack.c.l.b16 %v634
    %v1266 = vunpack.c.h.b16 %v634
    %v1267 = vunpack.c.l.b16 %v635
    %v1268 = vunpack.c.h.b16 %v635
    %v1269 = vunpack.c.l.b16 %v636
    %v1270 = vunpack.c.h.b16 %v636
    %v1271 = vunpack.c.l.b16 %v637
    %v1272 = vunpack.c.h.b16 %v637
    %v1273 = vunpack.c.l.b16 %v638
    %v1274 = vunpack.c.h.b16 %v638
    %v1275 = vunpack.c.l.b16 %v639
    %v1276 = vunpack.c.h.b16 %v639
    %v1277 = vunpack.c.l.b16 %v640
    %v1278 = vunpack.c.h.b16 %v640
    %v1279 = vunpack.c.l.b16 %v641
    %v1280 = vunpack.c.h.b16 %v641
    %v1281 = vunpack.c.l.b16 %v642
    %v1282 = vunpack.c.h.b16 %v642
    %v1283 = vunpack.c.l.b16 %v643
    %v1284 = vunpack.c.h.b16 %v643
    %v1285 = vunpack.c.l.b16 %v644
    %v1286 = vunpack.c.h.b16 %v644
    %v1287 = vunpack.c.l.b16 %v645
    %v1288 = vunpack.c.h.b16 %v645
    %v1289 = vunpack.c.l.b16 %v646
    %v1290 = vunpack.c.h.b16 %v646
    %v1291 = vunpack.c.l.b16 %v647
    %v1292 = vunpack.c.h.b16 %v647
    %v1293 = vunpack.c.l.b16 %v648
    %v1294 = vunpack.c.h.b16 %v648
    %v1295 = vunpack.c.l.b16 %v649
    %v1296 = vunpack.c.h.b16 %v649
    %v1297 = vunpack.c.l.b16 %v650
    %v1298 = vunpack.c.h.b16 %v650
    %v1299 = vunpack.c.l.b16 %v651
    %v1300 = vunpack.c.h.b16 %v651
    %v1301 = vunpack.c.l.b16 %v652
    %v1302 = vunpack.c.h.b16 %v652
    %v1303 = vunpack.c.l.b16 %v653
    %v1304 = vunpack.c.h.b16 %v653
    %v1305 = vunpack.c.l.b16 %v654
    %v1306 = vunpack.c.h.b16 %v654
    %v1307 = vunpack.c.l.b16 %v655
    %v1308 = vunpack.c.h.b16 %v655
    %v1309 = vunpack.c.l.b16 %v656
    %v1310 = vunpack.c.h.b16 %v656
    %v1311 = vunpack.c.l.b16 %v657
    %v1312 = vunpack.c.h.b16 %v657
    %v1313 = vunpack.c.l.b16 %v658
    %v1314 = vunpack.c.h.b16 %v658
    %v1315 = vunpack.c.l.b16 %v659
    %v1316 = vunpack.c.h.b16 %v659
    %v1317 = vunpack.c.l.b16 %v660
    %v1318 = vunpack.c.h.b16 %v660
    %v1319 = vunpack.c.l.b16 %v661
    %v1320 = vunpack.c.h.b16 %v661
    %v1321 = vunpack.c.l.b16 %v662
    %v1322 = vunpack.c.h.b16 %v662
    %v1323 = vunpack.c.l.b16 %v663
    %v1324 = vunpack.c.h.b16 %v663
    %v1325 = vunpack.c.l.b16 %v664
    %v1326 = vunpack.c.h.b16 %v664
    %v1327 = vunpack.c.l.b16 %v665
    %v1328 = vunpack.c.h.b16 %v665
    %v1329 = vunpack.c.l.b16 %v666
    %v1330 = vunpack.c.h.b16 %v666
    %v1331 = vunpack.c.l.b16 %v667
    %v1332 = vunpack.c.h.b16 %v667
    %v1333 = vunpack.c.l.b16 %v668
    %v1334 = vunpack.c.h.b16 %v668
    %v1335 = vunpack.c.l.b16 %v669
    %v1336 = vunpack.c.h.b16 %v669
    %v1337 = vunpack.c.l.b16 %v670
    %v1338 = vunpack.c.h.b16 %v670
    %v1339 = vunpack.c.l.b16 %v671
    %v1340 = vunpack.c.h.b16 %v671
    %v1341 = vunpack.c.l.b16 %v672
    %v1342 = vunpack.c.h.b16 %v672
    %v1343 = vunpack.c.l.b16 %v673
    %v1344 = vunpack.c.h.b16 %v673
    %v1345 = vunpack.c.l.b16 %v674
    %v1346 = vunpack.c.h.b16 %v674
    %v1347 = vunpack.c.l.b16 %v675
    %v1348 = vunpack.c.h.b16 %v675
    %v1349 = vpack.c.b16 %v905, %v901
    %v1350 = vpack.c.b16 %v906, %v902
    %v1351 = vpack.c.b16 %v907, %v903
    %v1352 = vpack.c.b16 %v908, %v904
    %v1353 = vpack.c.b16 %v913, %v909
    %v1354 = vpack.c.b16 %v914, %v910
    %v1355 = vpack.c.b16 %v915, %v911
    %v1356 = vpack.c.b16 %v916, %v912
    %v1357 = vpack.c.b16 %v921, %v917
    %v1358 = vpack.c.b16 %v922, %v918
    %v1359 = vpack.c.b16 %v923, %v919
    %v1360 = vpack.c.b16 %v924, %v920
    %v1361 = vpack.c.b16 %v929, %v925
    %v1362 = vpack.c.b16 %v930, %v926
    %v1363 = vpack.c.b16 %v931, %v927
    %v1364 = vpack.c.b16 %v932, %v928
    %v1365 = vpack.c.b16 %v937, %v933
    %v1366 = vpack.c.b16 %v938, %v934
    %v1367 = vpack.c.b16 %v939, %v935
    %v1368 = vpack.c.b16 %v940, %v936
    %v1369 = vpack.c.b16 %v945, %v941
    %v1370 = vpack.c.b16 %v946, %v942
    %v1371 = vpack.c.b16 %v947, %v943
    %v1372 = vpack.c.b16 %v948, %v944
    %v1373 = vpack.c.b16 %v953, %v949
    %v1374 = vpack.c.b16 %v954, %v950
    %v1375 = vpack.c.b16 %v955, %v951
    %v1376 = vpack.c.b16 %v956, %v952
    %v1377 = vpack.c.b16 %v961, %v957
    %v1378 = vpack.c.b16 %v962, %v958
    %v1379 = vpack.c.b16 %v963, %v959
    %v1380 = vpack.c.b16 %v964, %v960
    %v1381 = vpack.c.b16 %v969, %v965
    %v1382 = vpack.c.b16 %v970, %v966
    %v1383 = vpack.c.b16 %v971, %v967
    %v1384 = vpack.c.b16 %v972, %v968
    %v1385 = vpack.c.b16 %v977, %v973
    %v1386 = vpack.c.b16 %v978, %v974
    %v1387 = vpack.c.b16 %v979, %v975
    %v1388 = vpack.c.b16 %v980, %v976
    %v1389 = vpack.c.b16 %v985, %v981
    %v1390 = vpack.c.b16 %v986, %v982
    %v1391 = vpack.c.b16 %v987, %v983
    %v1392 = vpack.c.b16 %v988, %v984
    %v1393 = vpack.c.b16 %v993, %v989
    %v1394 = vpack.c.b16 %v994, %v990
    %v1395 = vpack.c.b16 %v995, %v991
    %v1396 = vpack.c.b16 %v996, %v992
    %v1397 = vpack.c.b16 %v1001, %v997
    %v1398 = vpack.c.b16 %v1002, %v998
    %v1399 = vpack.c.b16 %v1003, %v999
    %v1400 = vpack.c.b16 %v1004, %v1000
    %v1401 = vpack.c.b16 %v1009, %v1005
    %v1402 = vpack.c.b16 %v1010, %v1006
    %v1403 = vpack.c.b16 %v1011, %v1007
    %v1404 = vpack.c.b16 %v1012, %v1008
    %v1405 = vpack.c.b16 %v1017, %v1013
    %v1406 = vpack.c.b16 %v1018, %v1014
    %v1407 = vpack.c.b16 %v1019, %v1015
    %v1408 = vpack.c.b16 %v1020, %v1016
    %v1409 = vpack.c.b16 %v1025, %v1021
    %v1410 = vpack.c.b16 %v1026, %v1022
    %v1411 = vpack.c.b16 %v1027, %v1023
    %v1412 = vpack.c.b16 %v1028, %v1024
    %v1413 = vpack.c.b16 %v1033, %v1029
    %v1414 = vpack.c.b16 %v1034, %v1030
    %v1415 = vpack.c.b16 %v1035, %v1031
    %v1416 = vpack.c.b16 %v1036, %v1032
    %v1417 = vpack.c.b16 %v1041, %v1037
    %v1418 = vpack.c.b16 %v1042, %v1038
    %v1419 = vpack.c.b16 %v1043, %v1039
    %v1420 = vpack.c.b16 %v1044, %v1040
    %v1421 = vpack.c.b16 %v1049, %v1045
    %v1422 = vpack.c.b16 %v1050, %v1046
    %v1423 = vpack.c.b16 %v1051, %v1047
    %v1424 = vpack.c.b16 %v1052, %v1048
    %v1425 = vpack.c.b16 %v1057, %v1053
    %v1426 = vpack.c.b16 %v1058, %v1054
    %v1427 = vpack.c.b16 %v1059, %v1055
    %v1428 = vpack.c.b16 %v1060, %v1056
    %v1429 = vpack.c.b16 %v1065, %v1061
    %v1430 = vpack.c.b16 %v1066, %v1062
    %v1431 = vpack.c.b16 %v1067, %v1063
    %v1432 = vpack.c.b16 %v1068, %v1064
    %v1433 = vpack.c.b16 %v1073, %v1069
    %v1434 = vpack.c.b16 %v1074, %v1070
    %v1435 = vpack.c.b16 %v1075, %v1071
    %v1436 = vpack.c.b16 %v1076, %v1072
    %v1437 = vpack.c.b16 %v1081, %v1077
    %v1438 = vpack.c.b16 %v1082, %v1078
    %v1439 = vpack.c.b16 %v1083, %v1079
    %v1440 = vpack.c.b16 %v1084, %v1080
    %v1441 = vpack.c.b16 %v1089, %v1085
    %v1442 = vpack.c.b16 %v1090, %v1086
    %v1443 = vpack.c.b16 %v1091, %v1087
    %v1444 = vpack.c.b16 %v1092, %v1088
    %v1445 = vpack.c.b16 %v1097, %v1093
    %v1446 = vpack.c.b16 %v1098, %v1094
    %v1447 = vpack.c.b16 %v1099, %v1095
    %v1448 = vpack.c.b16 %v1100, %v1096
    %v1449 = vpack.c.b16 %v1105, %v1101
    %v1450 = vpack.c.b16 %v1106, %v1102
    %v1451 = vpack.c.b16 %v1107, %v1103
    %v1452 = vpack.c.b16 %v1108, %v1104
    %v1453 = vpack.c.b16 %v1113, %v1109
    %v1454 = vpack.c.b16 %v1114, %v1110
    %v1455 = vpack.c.b16 %v1115, %v1111
    %v1456 = vpack.c.b16 %v1116, %v1112
    %v1457 = vpack.c.b16 %v1121, %v1117
    %v1458 = vpack.c.b16 %v1122, %v1118
    %v1459 = vpack.c.b16 %v1123, %v1119
    %v1460 = vpack.c.b16 %v1124, %v1120
    %v1461 = vpack.c.b16 %v1129, %v1125
    %v1462 = vpack.c.b16 %v1130, %v1126
    %v1463 = vpack.c.b16 %v1131, %v1127
    %v1464 = vpack.c.b16 %v1132, %v1128
    %v1465 = vpack.c.b16 %v1137, %v1133
    %v1466 = vpack.c.b16 %v1138, %v1134
    %v1467 = vpack.c.b16 %v1139, %v1135
    %v1468 = vpack.c.b16 %v1140, %v1136
    %v1469 = vpack.c.b16 %v1145, %v1141
    %v1470 = vpack.c.b16 %v1146, %v1142
    %v1471 = vpack.c.b16 %v1147, %v1143
    %v1472 = vpack.c.b16 %v1148, %v1144
    %v1473 = vpack.c.b16 %v1153, %v1149
    %v1474 = vpack.c.b16 %v1154, %v1150
    %v1475 = vpack.c.b16 %v1155, %v1151
    %v1476 = vpack.c.b16 %v1156, %v1152
    %v1477 = vpack.c.b16 %v1161, %v1157
    %v1478 = vpack.c.b16 %v1162, %v1158
    %v1479 = vpack.c.b16 %v1163, %v1159
    %v1480 = vpack.c.b16 %v1164, %v1160
    %v1481 = vpack.c.b16 %v1169, %v1165
    %v1482 = vpack.c.b16 %v1170, %v1166
    %v1483 = vpack.c.b16 %v1171, %v1167
    %v1484 = vpack.c.b16 %v1172, %v1168
    %v1485 = vpack.c.b16 %v1177, %v1173
    %v1486 = vpack.c.b16 %v1178, %v1174
    %v1487 = vpack.c.b16 %v1179, %v1175
    %v1488 = vpack.c.b16 %v1180, %v1176
    %v1489 = vpack.c.b16 %v1185, %v1181
    %v1490 = vpack.c.b16 %v1186, %v1182
    %v1491 = vpack.c.b16 %v1187, %v1183
    %v1492 = vpack.c.b16 %v1188, %v1184
    %v1493 = vpack.c.b16 %v1193, %v1189
    %v1494 = vpack.c.b16 %v1194, %v1190
    %v1495 = vpack.c.b16 %v1195, %v1191
    %v1496 = vpack.c.b16 %v1196, %v1192
    %v1497 = vpack.c.b16 %v1201, %v1197
    %v1498 = vpack.c.b16 %v1202, %v1198
    %v1499 = vpack.c.b16 %v1203, %v1199
    %v1500 = vpack.c.b16 %v1204, %v1200
    %v1501 = vpack.c.b16 %v1209, %v1205
    %v1502 = vpack.c.b16 %v1210, %v1206
    %v1503 = vpack.c.b16 %v1211, %v1207
    %v1504 = vpack.c.b16 %v1212, %v1208
    %v1505 = vpack.c.b16 %v1217, %v1213
    %v1506 = vpack.c.b16 %v1218, %v1214
    %v1507 = vpack.c.b16 %v1219, %v1215
    %v1508 = vpack.c.b16 %v1220, %v1216
    %v1509 = vpack.c.b16 %v1225, %v1221
    %v1510 = vpack.c.b16 %v1226, %v1222
    %v1511 = vpack.c.b16 %v1227, %v1223
    %v1512 = vpack.c.b16 %v1228, %v1224
    %v1513 = vpack.c.b16 %v1233, %v1229
    %v1514 = vpack.c.b16 %v1234, %v1230
    %v1515 = vpack.c.b16 %v1235, %v1231
    %v1516 = vpack.c.b16 %v1236, %v1232
    %v1517 = vpack.c.b16 %v1241, %v1237
    %v1518 = vpack.c.b16 %v1242, %v1238
    %v1519 = vpack.c.b16 %v1243, %v1239
    %v1520 = vpack.c.b16 %v1244, %v1240
    %v1521 = vpack.c.b16 %v1249, %v1245
    %v1522 = vpack.c.b16 %v1250, %v1246
    %v1523 = vpack.c.b16 %v1251, %v1247
    %v1524 = vpack.c.b16 %v1252, %v1248
    %v1525 = vpack.c.b16 %v1257, %v1253
    %v1526 = vpack.c.b16 %v1258, %v1254
    %v1527 = vpack.c.b16 %v1259, %v1255
    %v1528 = vpack.c.b16 %v1260, %v1256
    %v1529 = vpack.c.b16 %v1265, %v1261
    %v1530 = vpack.c.b16 %v1266, %v1262
    %v1531 = vpack.c.b16 %v1267, %v1263
    %v1532 = vpack.c.b16 %v1268, %v1264
    %v1533 = vpack.c.b16 %v1273, %v1269
    %v1534 = vpack.c.b16 %v1274, %v1270
    %v1535 = vpack.c.b16 %v1275, %v1271
    %v1536 = vpack.c.b16 %v1276, %v1272
    %v1537 = vpack.c.b16 %v1281, %v1277
    %v1538 = vpack.c.b16 %v1282, %v1278
    %v1539 = vpack.c.b16 %v1283, %v1279
    %v1540 = vpack.c.b16 %v1284, %v1280
    %v1541 = vpack.c.b16 %v1289, %v1285
    %v1542 = vpack.c.b16 %v1290, %v1286
    %v1543 = vpack.c.b16 %v1291, %v1287
    %v1544 = vpack.c.b16 %v1292, %v1288
    %v1545 = vpack.c.b16 %v1297, %v1293
    %v1546 = vpack.c.b16 %v1298, %v1294
    %v1547 = vpack.c.b16 %v1299, %v1295
    %v1548 = vpack.c.b16 %v1300, %v1296
    %v1549 = vpack.c.b16 %v1305, %v1301
    %v1550 = vpack.c.b16 %v1306, %v1302
    %v1551 = vpack.c.b16 %v1307, %v1303
    %v1552 = vpack.c.b16 %v1308, %v1304
    %v1553 = vpack.c.b16 %v1313, %v1309
    %v1554 = vpack.c.b16 %v1314, %v1310
    %v1555 = vpack.c.b16 %v1315, %v1311
    %v1556 = vpack.c.b16 %v1316, %v1312
    %v1557 = vpack.c.b16 %v1321, %v1317
    %v1558 = vpack.c.b16 %v1322, %v1318
    %v1559 = vpack.c.b16 %v1323, %v1319
    %v1560 = vpack.c.b16 %v1324, %v1320
    %v1561 = vpack.c.b16 %v1329, %v1325
    %v1562 = vpack.c.b16 %v1330, %v1326
    %v1563 = vpack.c.b16 %v1331, %v1327
    %v1564 = vpack.c.b16 %v1332, %v1328
    %v1565 = vpack.c.b16 %v1337, %v1333
    %v1566 = vpack.c.b16 %v1338, %v1334
    %v1567 = vpack.c.b16 %v1339, %v1335
    %v1568 = vpack.c.b16 %v1340, %v1336
    %v1569 = vpack.c.b16 %v1345, %v1341
    %v1570 = vpack.c.b16 %v1346, %v1342
    %v1571 = vpack.c.b16 %v1347, %v1343
    %v1572 = vpack.c.b16 %v1348, %v1344
    %v1798 = vlaneseq
    %v1799 = vshrl.u32 %v1798, 7
    %v1800 = vsub.s32 0, %v1799
    %v1801 = vrot.slane %v676, %v1800
    %v1802 = vlaneseq
    %v1803 = vshrl.u32 %v1802, 7
    %v1804 = vsub.s32 1, %v1803
    %v1805 = vrot.slane %v676, %v1804
    %v1806 = vlaneseq
    %v1807 = vshrl.u32 %v1806, 7
    %v1808 = vsub.s32 2, %v1807
    %v1809 = vrot.slane %v676, %v1808
    %v1810 = vlaneseq
    %v1811 = vshrl.u32 %v1810, 7
    %v1812 = vsub.s32 3, %v1811
    %v1813 = vrot.slane %v676, %v1812
    %1818 = vmatprep.subr.bf16.mxu0 %v1350
    %1819 = vmatpush1.bf16.msra.mxu0 %v1349
    %1820 = vmatprep.subr.bf16.mxu0 %v1354
    %1821 = vmatpush1.bf16.msra.mxu0 %v1353
    %1822 = vmatprep.subr.bf16.mxu0 %v1358
    %1823 = vmatpush1.bf16.msra.mxu0 %v1357
    %1824 = vmatprep.subr.bf16.mxu0 %v1362
    %1825 = vmatpush1.bf16.msra.mxu0 %v1361
    %1826 = vmatprep.subr.bf16.mxu0 %v1366
    %1827 = vmatpush1.bf16.msra.mxu0 %v1365
    %1828 = vmatprep.subr.bf16.mxu0 %v1370
    %1829 = vmatpush1.bf16.msra.mxu0 %v1369
    %1830 = vmatprep.subr.bf16.mxu0 %v1374
    %1831 = vmatpush1.bf16.msra.mxu0 %v1373
    %1832 = vmatprep.subr.bf16.mxu0 %v1378
    %1833 = vmatpush1.bf16.msra.mxu0 %v1377
    %1834 = vmatprep.subr.bf16.mxu0 %v1382
    %1835 = vmatpush1.bf16.msra.mxu0 %v1381
    %1836 = vmatprep.subr.bf16.mxu0 %v1386
    %1837 = vmatpush1.bf16.msra.mxu0 %v1385
    %1838 = vmatprep.subr.bf16.mxu0 %v1390
    %1839 = vmatpush1.bf16.msra.mxu0 %v1389
    %1840 = vmatprep.subr.bf16.mxu0 %v1394
    %1841 = vmatpush1.bf16.msra.mxu0 %v1393
    %1842 = vmatprep.subr.bf16.mxu0 %v1398
    %1843 = vmatpush1.bf16.msra.mxu0 %v1397
    %1844 = vmatprep.subr.bf16.mxu0 %v1402
    %1845 = vmatpush1.bf16.msra.mxu0 %v1401
    %1846 = vmatprep.subr.bf16.mxu0 %v1406
    %1847 = vmatpush1.bf16.msra.mxu0 %v1405
    %1848 = vmatprep.subr.bf16.mxu0 %v1410
    %1849 = vmatpush1.bf16.msra.mxu0 %v1409
    %1850 = vmatprep.mubr.bf16.mxu0 %v446
    %1851 = vmatmul.mubr.bf16.gmra.mrb[0].mxu0 %v445
    %v1852 = vpop.f32.mrb[0].mxu0
    %v1853 = vadd.f32 %v1801, %v1852
    %v1854 = vpop.f32.mrb[0].mxu0
    %v1855 = vadd.f32 %v1805, %v1854
    %v1856 = vpop.f32.mrb[0].mxu0
    %v1857 = vpop.f32.mrb[0].mxu0
    %1858 = vdwg.mxu0
    %1859 = vmatprep.subr.bf16.mxu0 %v1414
    %1860 = vmatpush1.bf16.msra.mxu0 %v1413
    %1861 = vmatprep.subr.bf16.mxu0 %v1418
    %1862 = vmatpush1.bf16.msra.mxu0 %v1417
    %1863 = vmatprep.subr.bf16.mxu0 %v1422
    %1864 = vmatpush1.bf16.msra.mxu0 %v1421
    %1865 = vmatprep.subr.bf16.mxu0 %v1426
    %1866 = vmatpush1.bf16.msra.mxu0 %v1425
    %1867 = vmatprep.subr.bf16.mxu0 %v1430
    %1868 = vmatpush1.bf16.msra.mxu0 %v1429
    %1869 = vmatprep.subr.bf16.mxu0 %v1434
    %1870 = vmatpush1.bf16.msra.mxu0 %v1433
    %1871 = vmatprep.subr.bf16.mxu0 %v1438
    %1872 = vmatpush1.bf16.msra.mxu0 %v1437
    %1873 = vmatprep.subr.bf16.mxu0 %v1442
    %1874 = vmatpush1.bf16.msra.mxu0 %v1441
    %1875 = vmatprep.subr.bf16.mxu0 %v1446
    %1876 = vmatpush1.bf16.msra.mxu0 %v1445
    %1877 = vmatprep.subr.bf16.mxu0 %v1450
    %1878 = vmatpush1.bf16.msra.mxu0 %v1449
    %1879 = vmatprep.subr.bf16.mxu0 %v1454
    %1880 = vmatpush1.bf16.msra.mxu0 %v1453
    %1881 = vmatprep.subr.bf16.mxu0 %v1458
    %1882 = vmatpush1.bf16.msra.mxu0 %v1457
    %1883 = vmatprep.subr.bf16.mxu0 %v1462
    %1884 = vmatpush1.bf16.msra.mxu0 %v1461
    %1885 = vmatprep.subr.bf16.mxu0 %v1466
    %1886 = vmatpush1.bf16.msra.mxu0 %v1465
    %1887 = vmatprep.subr.bf16.mxu0 %v1470
    %1888 = vmatpush1.bf16.msra.mxu0 %v1469
    %1889 = vmatprep.subr.bf16.mxu0 %v1474
    %1890 = vmatpush1.bf16.msra.mxu0 %v1473
    %1891 = vmatprep.mubr.bf16.mxu0 %v448
    %1892 = vmatmul.mubr.bf16.gmra.mrb[0].mxu0 %v447
    %v1893 = vpop.f32.mrb[0].mxu0
    %v1894 = vadd.f32 %v1853, %v1893
    %v1895 = vpop.f32.mrb[0].mxu0
    %v1896 = vadd.f32 %v1855, %v1895
    %v1897 = vpop.f32.mrb[0].mxu0
    %v1898 = vpop.f32.mrb[0].mxu0
    %1899 = vdwg.mxu0
    %1900 = vmatprep.subr.bf16.mxu0 %v1478
    %1901 = vmatpush1.bf16.msra.mxu0 %v1477
    %1902 = vmatprep.subr.bf16.mxu0 %v1482
    %1903 = vmatpush1.bf16.msra.mxu0 %v1481
    %1904 = vmatprep.subr.bf16.mxu0 %v1486
    %1905 = vmatpush1.bf16.msra.mxu0 %v1485
    %1906 = vmatprep.subr.bf16.mxu0 %v1490
    %1907 = vmatpush1.bf16.msra.mxu0 %v1489
    %1908 = vmatprep.subr.bf16.mxu0 %v1494
    %1909 = vmatpush1.bf16.msra.mxu0 %v1493
    %1910 = vmatprep.subr.bf16.mxu0 %v1498
    %1911 = vmatpush1.bf16.msra.mxu0 %v1497
    %1912 = vmatprep.subr.bf16.mxu0 %v1502
    %1913 = vmatpush1.bf16.msra.mxu0 %v1501
    %1914 = vmatprep.subr.bf16.mxu0 %v1506
    %1915 = vmatpush1.bf16.msra.mxu0 %v1505
    %1916 = vmatprep.subr.bf16.mxu0 %v1510
    %1917 = vmatpush1.bf16.msra.mxu0 %v1509
    %1918 = vmatprep.subr.bf16.mxu0 %v1514
    %1919 = vmatpush1.bf16.msra.mxu0 %v1513
    %1920 = vmatprep.subr.bf16.mxu0 %v1518
    %1921 = vmatpush1.bf16.msra.mxu0 %v1517
    %1922 = vmatprep.subr.bf16.mxu0 %v1522
    %1923 = vmatpush1.bf16.msra.mxu0 %v1521
    %1924 = vmatprep.subr.bf16.mxu0 %v1526
    %1925 = vmatpush1.bf16.msra.mxu0 %v1525
    %1926 = vmatprep.subr.bf16.mxu0 %v1530
    %1927 = vmatpush1.bf16.msra.mxu0 %v1529
    %1928 = vmatprep.subr.bf16.mxu0 %v1534
    %1929 = vmatpush1.bf16.msra.mxu0 %v1533
    %1930 = vmatprep.subr.bf16.mxu0 %v1538
    %1931 = vmatpush1.bf16.msra.mxu0 %v1537
    %1932 = vmatprep.mubr.bf16.mxu0 %v450
    %1933 = vmatmul.mubr.bf16.gmra.mrb[0].mxu0 %v449
    %v1934 = vpop.f32.mrb[0].mxu0
    %v1935 = vadd.f32 %v1894, %v1934
    %v1936 = vpop.f32.mrb[0].mxu0
    %v1937 = vadd.f32 %v1896, %v1936
    %v1938 = vpop.f32.mrb[0].mxu0
    %v1939 = vpop.f32.mrb[0].mxu0
    %1940 = vdwg.mxu0
    %1941 = vmatprep.subr.bf16.mxu0 %v1542
    %1942 = vmatpush1.bf16.msra.mxu0 %v1541
    %1943 = vmatprep.subr.bf16.mxu0 %v1546
    %1944 = vmatpush1.bf16.msra.mxu0 %v1545
    %1945 = vmatprep.subr.bf16.mxu0 %v1550
    %1946 = vmatpush1.bf16.msra.mxu0 %v1549
    %1947 = vmatprep.subr.bf16.mxu0 %v1554
    %1948 = vmatpush1.bf16.msra.mxu0 %v1553
    %1949 = vmatprep.subr.bf16.mxu0 %v1558
    %1950 = vmatpush1.bf16.msra.mxu0 %v1557
    %1951 = vmatprep.subr.bf16.mxu0 %v1562
    %1952 = vmatpush1.bf16.msra.mxu0 %v1561
    %1953 = vmatprep.subr.bf16.mxu0 %v1566
    %1954 = vmatpush1.bf16.msra.mxu0 %v1565
    %1955 = vmatprep.subr.bf16.mxu0 %v1570
    %1956 = vmatpush1.bf16.msra.mxu0 %v1569
    %1957 = vmatprep.subr.bf16.mxu0 0
    %1958 = vmatpush1.bf16.msra.mxu0 0
    %1959 = vmatprep.subr.bf16.mxu0 0
    %1960 = vmatpush1.bf16.msra.mxu0 0
    %1961 = vmatprep.subr.bf16.mxu0 0
    %1962 = vmatpush1.bf16.msra.mxu0 0
    %1963 = vmatprep.subr.bf16.mxu0 0
    %1964 = vmatpush1.bf16.msra.mxu0 0
    %1965 = vmatprep.subr.bf16.mxu0 0
    %1966 = vmatpush1.bf16.msra.mxu0 0
    %1967 = vmatprep.subr.bf16.mxu0 0
    %1968 = vmatpush1.bf16.msra.mxu0 0
    %1969 = vmatprep.subr.bf16.mxu0 0
    %1970 = vmatpush1.bf16.msra.mxu0 0
    %1971 = vmatprep.subr.bf16.mxu0 0
    %1972 = vmatpush1.bf16.msra.mxu0 0
    %1973 = vmatprep.mubr.bf16.mxu0 0
    %1974 = vmatmul.mubr.bf16.gmra.mrb[0].mxu0 %v451
    %v1975 = vpop.f32.mrb[0].mxu0
    %v1976 = vadd.f32 %v1935, %v1975
    %v1977 = vpop.f32.mrb[0].mxu0
    %v1978 = vadd.f32 %v1937, %v1977
    %v1979 = vpop.f32.mrb[0].mxu0
    %v1980 = vpop.f32.mrb[0].mxu0
    %1981 = vdwg.mxu0
    %1982 = vmatprep.subr.bf16.mxu0 %v1352
    %1983 = vmatpush1.bf16.msra.mxu0 %v1351
    %1984 = vmatprep.subr.bf16.mxu0 %v1356
    %1985 = vmatpush1.bf16.msra.mxu0 %v1355
    %1986 = vmatprep.subr.bf16.mxu0 %v1360
    %1987 = vmatpush1.bf16.msra.mxu0 %v1359
    %1988 = vmatprep.subr.bf16.mxu0 %v1364
    %1989 = vmatpush1.bf16.msra.mxu0 %v1363
    %1990 = vmatprep.subr.bf16.mxu0 %v1368
    %1991 = vmatpush1.bf16.msra.mxu0 %v1367
    %1992 = vmatprep.subr.bf16.mxu0 %v1372
    %1993 = vmatpush1.bf16.msra.mxu0 %v1371
    %1994 = vmatprep.subr.bf16.mxu0 %v1376
    %1995 = vmatpush1.bf16.msra.mxu0 %v1375
    %1996 = vmatprep.subr.bf16.mxu0 %v1380
    %1997 = vmatpush1.bf16.msra.mxu0 %v1379
    %1998 = vmatprep.subr.bf16.mxu0 %v1384
    %1999 = vmatpush1.bf16.msra.mxu0 %v1383
    %2000 = vmatprep.subr.bf16.mxu0 %v1388
    %2001 = vmatpush1.bf16.msra.mxu0 %v1387
    %2002 = vmatprep.subr.bf16.mxu0 %v1392
    %2003 = vmatpush1.bf16.msra.mxu0 %v1391
    %2004 = vmatprep.subr.bf16.mxu0 %v1396
    %2005 = vmatpush1.bf16.msra.mxu0 %v1395
    %2006 = vmatprep.subr.bf16.mxu0 %v1400
    %2007 = vmatpush1.bf16.msra.mxu0 %v1399
    %2008 = vmatprep.subr.bf16.mxu0 %v1404
    %2009 = vmatpush1.bf16.msra.mxu0 %v1403
    %2010 = vmatprep.subr.bf16.mxu0 %v1408
    %2011 = vmatpush1.bf16.msra.mxu0 %v1407
    %2012 = vmatprep.subr.bf16.mxu0 %v1412
    %2013 = vmatpush1.bf16.msra.mxu0 %v1411
    %2014 = vmatprep.mubr.bf16.mxu0 %v446
    %2015 = vmatmul.mubr.bf16.gmra.mrb[0].mxu0 %v445
    %v2016 = vpop.f32.mrb[0].mxu0
    %v2017 = vadd.f32 %v1809, %v2016
    %v2018 = vpop.f32.mrb[0].mxu0
    %v2019 = vadd.f32 %v1813, %v2018
    %v2020 = vpop.f32.mrb[0].mxu0
    %v2021 = vpop.f32.mrb[0].mxu0
    %2022 = vdwg.mxu0
    %2023 = vmatprep.subr.bf16.mxu0 %v1416
    %2024 = vmatpush1.bf16.msra.mxu0 %v1415
    %2025 = vmatprep.subr.bf16.mxu0 %v1420
    %2026 = vmatpush1.bf16.msra.mxu0 %v1419
    %2027 = vmatprep.subr.bf16.mxu0 %v1424
    %2028 = vmatpush1.bf16.msra.mxu0 %v1423
    %2029 = vmatprep.subr.bf16.mxu0 %v1428
    %2030 = vmatpush1.bf16.msra.mxu0 %v1427
    %2031 = vmatprep.subr.bf16.mxu0 %v1432
    %2032 = vmatpush1.bf16.msra.mxu0 %v1431
    %2033 = vmatprep.subr.bf16.mxu0 %v1436
    %2034 = vmatpush1.bf16.msra.mxu0 %v1435
    %2035 = vmatprep.subr.bf16.mxu0 %v1440
    %2036 = vmatpush1.bf16.msra.mxu0 %v1439
    %2037 = vmatprep.subr.bf16.mxu0 %v1444
    %2038 = vmatpush1.bf16.msra.mxu0 %v1443
    %2039 = vmatprep.subr.bf16.mxu0 %v1448
    %2040 = vmatpush1.bf16.msra.mxu0 %v1447
    %2041 = vmatprep.subr.bf16.mxu0 %v1452
    %2042 = vmatpush1.bf16.msra.mxu0 %v1451
    %2043 = vmatprep.subr.bf16.mxu0 %v1456
    %2044 = vmatpush1.bf16.msra.mxu0 %v1455
    %2045 = vmatprep.subr.bf16.mxu0 %v1460
    %2046 = vmatpush1.bf16.msra.mxu0 %v1459
    %2047 = vmatprep.subr.bf16.mxu0 %v1464
    %2048 = vmatpush1.bf16.msra.mxu0 %v1463
    %2049 = vmatprep.subr.bf16.mxu0 %v1468
    %2050 = vmatpush1.bf16.msra.mxu0 %v1467
    %2051 = vmatprep.subr.bf16.mxu0 %v1472
    %2052 = vmatpush1.bf16.msra.mxu0 %v1471
    %2053 = vmatprep.subr.bf16.mxu0 %v1476
    %2054 = vmatpush1.bf16.msra.mxu0 %v1475
    %2055 = vmatprep.mubr.bf16.mxu0 %v448
    %2056 = vmatmul.mubr.bf16.gmra.mrb[0].mxu0 %v447
    %v2057 = vpop.f32.mrb[0].mxu0
    %v2058 = vadd.f32 %v2017, %v2057
    %v2059 = vpop.f32.mrb[0].mxu0
    %v2060 = vadd.f32 %v2019, %v2059
    %v2061 = vpop.f32.mrb[0].mxu0
    %v2062 = vpop.f32.mrb[0].mxu0
    %2063 = vdwg.mxu0
    %2064 = vmatprep.subr.bf16.mxu0 %v1480
    %2065 = vmatpush1.bf16.msra.mxu0 %v1479
    %2066 = vmatprep.subr.bf16.mxu0 %v1484
    %2067 = vmatpush1.bf16.msra.mxu0 %v1483
    %2068 = vmatprep.subr.bf16.mxu0 %v1488
    %2069 = vmatpush1.bf16.msra.mxu0 %v1487
    %2070 = vmatprep.subr.bf16.mxu0 %v1492
    %2071 = vmatpush1.bf16.msra.mxu0 %v1491
    %2072 = vmatprep.subr.bf16.mxu0 %v1496
    %2073 = vmatpush1.bf16.msra.mxu0 %v1495
    %2074 = vmatprep.subr.bf16.mxu0 %v1500
    %2075 = vmatpush1.bf16.msra.mxu0 %v1499
    %2076 = vmatprep.subr.bf16.mxu0 %v1504
    %2077 = vmatpush1.bf16.msra.mxu0 %v1503
    %2078 = vmatprep.subr.bf16.mxu0 %v1508
    %2079 = vmatpush1.bf16.msra.mxu0 %v1507
    %2080 = vmatprep.subr.bf16.mxu0 %v1512
    %2081 = vmatpush1.bf16.msra.mxu0 %v1511
    %2082 = vmatprep.subr.bf16.mxu0 %v1516
    %2083 = vmatpush1.bf16.msra.mxu0 %v1515
    %2084 = vmatprep.subr.bf16.mxu0 %v1520
    %2085 = vmatpush1.bf16.msra.mxu0 %v1519
    %2086 = vmatprep.subr.bf16.mxu0 %v1524
    %2087 = vmatpush1.bf16.msra.mxu0 %v1523
    %2088 = vmatprep.subr.bf16.mxu0 %v1528
    %2089 = vmatpush1.bf16.msra.mxu0 %v1527
    %2090 = vmatprep.subr.bf16.mxu0 %v1532
    %2091 = vmatpush1.bf16.msra.mxu0 %v1531
    %2092 = vmatprep.subr.bf16.mxu0 %v1536
    %2093 = vmatpush1.bf16.msra.mxu0 %v1535
    %2094 = vmatprep.subr.bf16.mxu0 %v1540
    %2095 = vmatpush1.bf16.msra.mxu0 %v1539
    %2096 = vmatprep.mubr.bf16.mxu0 %v450
    %2097 = vmatmul.mubr.bf16.gmra.mrb[0].mxu0 %v449
    %v2098 = vpop.f32.mrb[0].mxu0
    %v2099 = vadd.f32 %v2058, %v2098
    %v2100 = vpop.f32.mrb[0].mxu0
    %v2101 = vadd.f32 %v2060, %v2100
    %v2102 = vpop.f32.mrb[0].mxu0
    %v2103 = vpop.f32.mrb[0].mxu0
    %2104 = vdwg.mxu0
    %2105 = vmatprep.subr.bf16.mxu0 %v1544
    %2106 = vmatpush1.bf16.msra.mxu0 %v1543
    %2107 = vmatprep.subr.bf16.mxu0 %v1548
    %2108 = vmatpush1.bf16.msra.mxu0 %v1547
    %2109 = vmatprep.subr.bf16.mxu0 %v1552
    %2110 = vmatpush1.bf16.msra.mxu0 %v1551
    %2111 = vmatprep.subr.bf16.mxu0 %v1556
    %2112 = vmatpush1.bf16.msra.mxu0 %v1555
    %2113 = vmatprep.subr.bf16.mxu0 %v1560
    %2114 = vmatpush1.bf16.msra.mxu0 %v1559
    %2115 = vmatprep.subr.bf16.mxu0 %v1564
    %2116 = vmatpush1.bf16.msra.mxu0 %v1563
    %2117 = vmatprep.subr.bf16.mxu0 %v1568
    %2118 = vmatpush1.bf16.msra.mxu0 %v1567
    %2119 = vmatprep.subr.bf16.mxu0 %v1572
    %2120 = vmatpush1.bf16.msra.mxu0 %v1571
    %2121 = vmatprep.subr.bf16.mxu0 0
    %2122 = vmatpush1.bf16.msra.mxu0 0
    %2123 = vmatprep.subr.bf16.mxu0 0
    %2124 = vmatpush1.bf16.msra.mxu0 0
    %2125 = vmatprep.subr.bf16.mxu0 0
    %2126 = vmatpush1.bf16.msra.mxu0 0
    %2127 = vmatprep.subr.bf16.mxu0 0
    %2128 = vmatpush1.bf16.msra.mxu0 0
    %2129 = vmatprep.subr.bf16.mxu0 0
    %2130 = vmatpush1.bf16.msra.mxu0 0
    %2131 = vmatprep.subr.bf16.mxu0 0
    %2132 = vmatpush1.bf16.msra.mxu0 0
    %2133 = vmatprep.subr.bf16.mxu0 0
    %2134 = vmatpush1.bf16.msra.mxu0 0
    %2135 = vmatprep.subr.bf16.mxu0 0
    %2136 = vmatpush1.bf16.msra.mxu0 0
    %2137 = vmatprep.mubr.bf16.mxu0 0
    %2138 = vmatmul.mubr.bf16.gmra.mrb[0].mxu0 %v451
    %v2139 = vpop.f32.mrb[0].mxu0
    %v2140 = vadd.f32 %v2099, %v2139
    %v2141 = vpop.f32.mrb[0].mxu0
    %v2142 = vadd.f32 %v2101, %v2141
    %v2143 = vpop.f32.mrb[0].mxu0
    %v2144 = vpop.f32.mrb[0].mxu0
    %2145 = vdwg.mxu0
    %v2146 = vsub.f32 0.0, %v1976
    %v2147 = vmul.f32 %v2146, 1.442695
    %v2148 = vpow.pop %v2147
    %v2149 = vadd.f32 %v2148, 1.0
    %v2150 = vrcp.pop %v2149
    %v2151 = vmul.f32 1.0, %v2150
    %v2152 = vsub.f32 0.0, %v1978
    %v2153 = vmul.f32 %v2152, 1.442695
    %v2154 = vpow.pop %v2153
    %v2155 = vadd.f32 %v2154, 1.0
    %v2156 = vrcp.pop %v2155
    %v2157 = vmul.f32 1.0, %v2156
    %v2158 = vtanh.pop %v2140
    %v2159 = vsub.f32 0.0, %v2142
    %v2160 = vmul.f32 %v2159, 1.442695
    %v2161 = vpow.pop %v2160
    %v2162 = vadd.f32 %v2161, 1.0
    %v2163 = vrcp.pop %v2162
    %v2164 = vmul.f32 1.0, %v2163
    %v2165 = vld [vmem:[%s7] sm:$0x1]
    %v2166 = vmul.f32 %v2157, %v2165
    %v2167 = vmul.f32 %v2151, %v2158
    %v2168 = vadd.f32 %v2166, %v2167
    %v2169 = vtanh.pop %v2168
    %v2170 = vmul.f32 %v2164, %v2169
    %v2171 = vpack.c.bf16 %v2170, %v2170
    %v2172 = vld [vmem:[%s10] sm:$0xf]
    %v2173 = vld [vmem:[%s10 + $0x4] sm:$0xf]
    %v2174 = vld [vmem:[%s10 + $0x8] sm:$0xf]
    %v2175 = vld [vmem:[%s10 + $0xc] sm:$0xf]
    %v2176 = vld [vmem:[%s10 + $0x10] sm:$0xf]
    %v2177 = vld [vmem:[%s10 + $0x14] sm:$0xf]
    %v2178 = vld [vmem:[%s10 + $0x18] sm:$0xf]
    %v2179 = vld [vmem:[%s10 + $0x1c] sm:$0xf]
    %v2180 = vld [vmem:[%s10 + $0x20] sm:$0xf]
    %v2181 = vld [vmem:[%s10 + $0x24] sm:$0xf]
    %v2182 = vld [vmem:[%s10 + $0x28] sm:$0xf]
    %v2183 = vld [vmem:[%s10 + $0x2c] sm:$0xf]
    %v2184 = vld [vmem:[%s10 + $0x30] sm:$0xf]
    %v2185 = vld [vmem:[%s10 + $0x34] sm:$0xf]
    %v2186 = vld [vmem:[%s10 + $0x38] sm:$0xf]
    %v2187 = vld [vmem:[%s10 + $0x3c] sm:$0xf]
    %v2188 = vld [vmem:[%s11] sm:$0x1]
    %v2205 = vunpack.c.l.b16 %v2172
    %v2206 = vunpack.c.l.b16 %v2173
    %v2207 = vunpack.c.l.b16 %v2174
    %v2208 = vunpack.c.l.b16 %v2175
    %v2209 = vunpack.c.l.b16 %v2176
    %v2210 = vunpack.c.l.b16 %v2177
    %v2211 = vunpack.c.l.b16 %v2178
    %v2212 = vunpack.c.l.b16 %v2179
    %v2213 = vunpack.c.l.b16 %v2180
    %v2214 = vunpack.c.l.b16 %v2181
    %v2215 = vunpack.c.l.b16 %v2182
    %v2216 = vunpack.c.l.b16 %v2183
    %v2217 = vunpack.c.l.b16 %v2184
    %v2218 = vunpack.c.l.b16 %v2185
    %v2219 = vunpack.c.l.b16 %v2186
    %v2220 = vunpack.c.l.b16 %v2187
    %v2221 = vpack.c.b16 %v2206, %v2205
    %v2222 = vpack.c.b16 %v2208, %v2207
    %v2223 = vpack.c.b16 %v2210, %v2209
    %v2224 = vpack.c.b16 %v2212, %v2211
    %v2225 = vpack.c.b16 %v2214, %v2213
    %v2226 = vpack.c.b16 %v2216, %v2215
    %v2227 = vpack.c.b16 %v2218, %v2217
    %v2228 = vpack.c.b16 %v2220, %v2219
    %2237 = vmatprep.subr.bf16.mxu0 0
    %2238 = vmatpush1.bf16.msra.mxu0 %v2221
    %2239 = vmatprep.subr.bf16.mxu0 0
    %2240 = vmatpush1.bf16.msra.mxu0 %v2222
    %2241 = vmatprep.subr.bf16.mxu0 0
    %2242 = vmatpush1.bf16.msra.mxu0 %v2223
    %2243 = vmatprep.subr.bf16.mxu0 0
    %2244 = vmatpush1.bf16.msra.mxu0 %v2224
    %2245 = vmatprep.subr.bf16.mxu0 0
    %2246 = vmatpush1.bf16.msra.mxu0 %v2225
    %2247 = vmatprep.subr.bf16.mxu0 0
    %2248 = vmatpush1.bf16.msra.mxu0 %v2226
    %2249 = vmatprep.subr.bf16.mxu0 0
    %2250 = vmatpush1.bf16.msra.mxu0 %v2227
    %2251 = vmatprep.subr.bf16.mxu0 0
    %2252 = vmatpush1.bf16.msra.mxu0 %v2228
    %2253 = vmatprep.subr.bf16.mxu0 0
    %2254 = vmatpush1.bf16.msra.mxu0 0
    %2255 = vmatprep.subr.bf16.mxu0 0
    %2256 = vmatpush1.bf16.msra.mxu0 0
    %2257 = vmatprep.subr.bf16.mxu0 0
    %2258 = vmatpush1.bf16.msra.mxu0 0
    %2259 = vmatprep.subr.bf16.mxu0 0
    %2260 = vmatpush1.bf16.msra.mxu0 0
    %2261 = vmatprep.subr.bf16.mxu0 0
    %2262 = vmatpush1.bf16.msra.mxu0 0
    %2263 = vmatprep.subr.bf16.mxu0 0
    %2264 = vmatpush1.bf16.msra.mxu0 0
    %2265 = vmatprep.subr.bf16.mxu0 0
    %2266 = vmatpush1.bf16.msra.mxu0 0
    %2267 = vmatprep.subr.bf16.mxu0 0
    %2268 = vmatpush1.bf16.msra.mxu0 0
    %2269 = vmatprep.mubr.bf16.mxu0 0
    %2270 = vmatmul.mubr.bf16.gmra.mrb[0].mxu0 %v2171
    %v2271 = vpop.f32.mrb[0].mxu0
    %v2272 = vadd.f32 %v2188, %v2271
    %v2273 = vpop.f32.mrb[0].mxu0
    %v2274 = vpop.f32.mrb[0].mxu0
    %v2275 = vpop.f32.mrb[0].mxu0
    %2276 = vdwg.mxu0
    %vm2277 = vcmask 24576
    %2278 = vst.msk [vmem:[#allocation5] sm:$0x1] %vm2277, %v2272
    %2279 = vst [vmem:[#allocation6] sm:$0x1] %v2170
    %2280 = vst [vmem:[#allocation8] sm:$0x1] %v2168
    // Predicated region
    $region54: #{tpu_custom_call.1} parent=1 // pred_check
      _
    $region55: #{tpu_custom_call.1} parent=1 // pred_check_branch
      %2282 = sbr.rel (0) target = $region57
    $region56: #{tpu_custom_call.1} parent=1 // pred_region
      %s2284 = ssub.s32 16, 16
      %2285 = vsyncadd [#allocation4], %s2284
      %s2287 = sshll.u32 [#allocation5], 4
      %s2288 = int_to_ptr.vmem [resolvable:$true] %s2287
      %2290 = dma.vmem_to_hbm [thread:$0]  %s2288, 16, %s12, [#allocation4]
    $region57: #{tpu_custom_call.1} parent=1 // pred_fallthru
      _
    // Predicated region
    $region58: #{tpu_custom_call.1} parent=1 // pred_check
      _
    $region59: #{tpu_custom_call.1} parent=1 // pred_check_branch
      %2292 = sbr.rel (0) target = $region61
    $region60: #{tpu_custom_call.1} parent=1 // pred_region
      %s2294 = ssub.s32 16, 16
      %2295 = vsyncadd [#allocation7], %s2294
      %s2297 = sshll.u32 [#allocation6], 4
      %s2298 = int_to_ptr.vmem [resolvable:$true] %s2297
      %2300 = dma.vmem_to_hbm [thread:$0]  %s2298, 16, %s13, [#allocation7]
    $region61: #{tpu_custom_call.1} parent=1 // pred_fallthru
      _
    // Predicated region
    $region62: #{tpu_custom_call.1} parent=1 // pred_check
      _
    $region63: #{tpu_custom_call.1} parent=1 // pred_check_branch
      %2302 = sbr.rel (0) target = $region65
    $region64: #{tpu_custom_call.1} parent=1 // pred_region
      %s2304 = ssub.s32 16, 16
      %2305 = vsyncadd [#allocation7], %s2304
      %s2307 = sshll.u32 [#allocation8], 4
      %s2308 = int_to_ptr.vmem [resolvable:$true] %s2307
      %2310 = dma.vmem_to_hbm [thread:$0]  %s2308, 16, %s14, [#allocation7]
    $region65: #{tpu_custom_call.1} parent=1 // pred_fallthru
      _
    // Predicated region
    $region66: #{tpu_custom_call.1} parent=1 // pred_check
      _
    $region67: #{tpu_custom_call.1} parent=1 // pred_check_branch
      %2312 = sbr.rel (0) target = $region69
    $region68: #{tpu_custom_call.1} parent=1 // pred_region
      %2313 = dma.done [#allocation4], 16
    $region69: #{tpu_custom_call.1} parent=1 // pred_fallthru
      _
    // Predicated region
    $region70: #{tpu_custom_call.1} parent=1 // pred_check
      _
    $region71: #{tpu_custom_call.1} parent=1 // pred_check_branch
      %2315 = sbr.rel (0) target = $region73
    $region72: #{tpu_custom_call.1} parent=1 // pred_region
      %2316 = dma.done [#allocation7], 16
    $region73: #{tpu_custom_call.1} parent=1 // pred_fallthru
      _
    // Predicated region
    $region74: #{tpu_custom_call.1} parent=1 // pred_check
      _
    $region75: #{tpu_custom_call.1} parent=1 // pred_check_branch
      %2318 = sbr.rel (0) target = $region77
    $region76: #{tpu_custom_call.1} parent=1 // pred_region
      %2319 = dma.done [#allocation7], 16
    $region77: #{tpu_custom_call.1} parent=1 // pred_fallthru
      _
    %2320 = vsyncpa [#allocation3], 1
    %2321 = vsyncpa [#allocation4], 1
    %2322 = vsyncpa [#allocation7], 1

</llo_original>
